<compile_context>
chip_gen: v7x
topology: tpu7x:2x2x1
jax: 0.10.0
libtpu: 0.0.40
codegen_flags: <defaults>
</compile_context>

<pallas_src>
import functools

import jax
import jax.numpy as jnp
from jax import lax
from jax.experimental import pallas as pl
from jax.experimental.pallas import tpu as pltpu


def _zoneout_lstm_seq_kernel(x_ref, h0_ref, c0_ref, w_ih_t_ref, w_hh_t_ref,
                             b_ref, h_out_ref, c_out_ref, gx_sc,
                             *, seq_len, batch, hidden_size, zoneout_rate):
    T, B, H = seq_len, batch, hidden_size
    p = jnp.float32(zoneout_rate)

    # -------- Phase 1 (off the serial path): bulk input projection --------
    # gates_x[t*B:(t+1)*B] = x[t] @ W_ih^T + (b_ih + b_hh), all T at once.
    x_all = x_ref[...].astype(jnp.float32)                       # (T*B, I)
    gx = jnp.dot(x_all, w_ih_t_ref[...],
                 preferred_element_type=jnp.float32)             # (T*B, 4H)
    gx_sc[...] = gx + b_ref[...]           # bias broadcast happens ONCE here.

    # Hoist weight load out of the loop (resident VMEM value).
    w_hh_t = w_hh_t_ref[...]                                     # (H, 4H)

    # -------- Phase 2: serial recurrence, only h @ W_hh^T inside --------
    def step(t, carry):
        h, c = carry                                             # (B, H) f32
        row = pl.multiple_of(t * B, B)                           # aligned slice
        gates = gx_sc[pl.ds(row, B), :] + jnp.dot(
            h, w_hh_t, preferred_element_type=jnp.float32)       # (B, 4H)

        # Two full-width (B, 4H) EUP passes, sliced per gate (i, f, g, o).
        sig = jax.nn.sigmoid(gates)
        th = jnp.tanh(gates)
        i_g = sig[:, 0 * H:1 * H]
        f_g = sig[:, 1 * H:2 * H]
        g_g = th[:, 2 * H:3 * H]
        o_g = sig[:, 3 * H:4 * H]

        c_new = f_g * c + i_g * g_g
        h_new = o_g * jnp.tanh(c_new)

        # Eval-mode zoneout blend (keep previous state with prob p).
        h_b = p * h + (1.0 - p) * h_new
        c_b = p * c + (1.0 - p) * c_new

        # Stores land in the VMEM-resident output blocks; HBM writeback is a
        # single bulk DMA per output when the kernel finishes.
        h_out_ref[t] = h_b.astype(h_out_ref.dtype)
        c_out_ref[t] = c_b.astype(c_out_ref.dtype)
        return h_b, c_b

    h0 = h0_ref[...].astype(jnp.float32)
    c0 = c0_ref[...].astype(jnp.float32)
    # Short fixed trip count -> unroll for LLO scheduler visibility.
    lax.fori_loop(0, T, step, (h0, c0), unroll=(T <= 16))


def zoneout_lstm_sequence(x_seq, h0, c0, w_ih, w_hh, b_ih, b_hh,
                          zoneout_rate=0.1):
    """Fused LSTMCell + eval-mode zoneout over a whole sequence.

    x_seq: (T, B, I); h0, c0: (B, H); w_ih: (4H, I); w_hh: (4H, H);
    b_ih, b_hh: (4H,).  Returns (h_all, c_all), each (T, B, H).
    """
    T, B, I = x_seq.shape
    H = h0.shape[-1]

    # One-time glue (pure XLA metadata / tiny ops, outside the kernel).
    x2d = x_seq.reshape(T * B, I)                         # (T*B, I)
    w_ih_t = jnp.transpose(w_ih)                          # (I, 4H)
    w_hh_t = jnp.transpose(w_hh)                          # (H, 4H)
    bias = (b_ih + b_hh).reshape(1, 4 * H)                # (1, 4H)

    kernel = functools.partial(_zoneout_lstm_seq_kernel,
                               seq_len=T, batch=B, hidden_size=H,
                               zoneout_rate=float(zoneout_rate))

    grid_spec = pltpu.PrefetchScalarGridSpec(
        num_scalar_prefetch=0,
        grid=(1,),
        in_specs=[
            pl.BlockSpec((T * B, I), lambda i: (0, 0)),       # all inputs
            pl.BlockSpec((B, H), lambda i: (0, 0)),           # h0
            pl.BlockSpec((B, H), lambda i: (0, 0)),           # c0
            pl.BlockSpec((I, 4 * H), lambda i: (0, 0)),       # W_ih^T
            pl.BlockSpec((H, 4 * H), lambda i: (0, 0)),       # W_hh^T
            pl.BlockSpec((1, 4 * H), lambda i: (0, 0)),       # combined bias
        ],
        out_specs=[
            pl.BlockSpec((T, B, H), lambda i: (0, 0, 0)),
            pl.BlockSpec((T, B, H), lambda i: (0, 0, 0)),
        ],
        scratch_shapes=[
            pltpu.VMEM((T * B, 4 * H), jnp.float32),          # gates_x
        ],
    )

    h_all, c_all = pl.pallas_call(
        kernel,
        out_shape=(jax.ShapeDtypeStruct((T, B, H), h0.dtype),
                   jax.ShapeDtypeStruct((T, B, H), c0.dtype)),
        grid_spec=grid_spec,
        # Single grid step; the recurrence is serial inside the kernel.
        # (On v7x a leading "parallel" axis over independent sequences would
        #  engage the second TensorCore; only one sequence here.)
        compiler_params=pltpu.CompilerParams(
            dimension_semantics=("arbitrary",)),
    )(x2d, h0, c0, w_ih_t, w_hh_t, bias)
    return h_all, c_all


def zoneout_lstm_cell(x, h, c, w_ih, w_hh, b_ih, b_hh, zoneout_rate=0.1):
    """Single-step interface matching PyTorch ZoneOutCell.forward (eval mode)."""
    h_all, c_all = zoneout_lstm_sequence(x[None], h, c, w_ih, w_hh, b_ih, b_hh,
                                         zoneout_rate)
    return h_all[0], c_all[0]


# -------------------------- pure-JAX reference --------------------------

def _reference_cell(x, h, c, w_ih, w_hh, b_ih, b_hh, p):
    gates = x @ w_ih.T + b_ih + h @ w_hh.T + b_hh
    H = h.shape[-1]
    i_g = jax.nn.sigmoid(gates[:, 0 * H:1 * H])
    f_g = jax.nn.sigmoid(gates[:, 1 * H:2 * H])
    g_g = jnp.tanh(gates[:, 2 * H:3 * H])
    o_g = jax.nn.sigmoid(gates[:, 3 * H:4 * H])
    c_new = f_g * c + i_g * g_g
    h_new = o_g * jnp.tanh(c_new)
    return p * h + (1 - p) * h_new, p * c + (1 - p) * c_new


def _reference_sequence(x_seq, h0, c0, w_ih, w_hh, b_ih, b_hh, p):
    h, c = h0, c0
    hs, cs = [], []
    for t in range(x_seq.shape[0]):
        h, c = _reference_cell(x_seq[t], h, c, w_ih, w_hh, b_ih, b_hh, p)
        hs.append(h)
        cs.append(c)
    return jnp.stack(hs, axis=0), jnp.stack(cs, axis=0)


if __name__ == "__main__":
    # B=8 fills the f32 sublane dimension; I=16, H=32 match
    # ZoneOutCell(LSTMCell(16, 32), 0.1); T=8 exercises the in-kernel loop.
    T, B, I, H = 8, 8, 16, 32
    zoneout_rate = 0.1

    key = jax.random.PRNGKey(0)
    kx, kh, kc, k1, k2, k3, k4 = jax.random.split(key, 7)

    # PyTorch LSTMCell default init: U(-1/sqrt(H), 1/sqrt(H)).
    bound = 1.0 / jnp.sqrt(jnp.float32(H))
    w_ih = jax.random.uniform(k1, (4 * H, I), jnp.float32, -bound, bound)
    w_hh = jax.random.uniform(k2, (4 * H, H), jnp.float32, -bound, bound)
    b_ih = jax.random.uniform(k3, (4 * H,), jnp.float32, -bound, bound)
    b_hh = jax.random.uniform(k4, (4 * H,), jnp.float32, -bound, bound)

    x_seq = jax.random.normal(kx, (T, B, I), jnp.float32)
    h0 = jax.random.normal(kh, (B, H), jnp.float32)
    c0 = jax.random.normal(kc, (B, H), jnp.float32)

    # Fused whole-sequence kernel.
    h_all, c_all = zoneout_lstm_sequence(x_seq, h0, c0, w_ih, w_hh, b_ih, b_hh,
                                         zoneout_rate)
    jax.block_until_ready((h_all, c_all))

    h_ref, c_ref = _reference_sequence(x_seq, h0, c0, w_ih, w_hh, b_ih, b_hh,
                                       zoneout_rate)
    assert jnp.allclose(h_all, h_ref, atol=1e-4, rtol=1e-4), "hidden seq mismatch"
    assert jnp.allclose(c_all, c_ref, atol=1e-4, rtol=1e-4), "cell seq mismatch"

    # Single-step interface (same semantics as ZoneOutCell.forward, eval mode).
    h1, c1 = zoneout_lstm_cell(x_seq[0], h0, c0, w_ih, w_hh, b_ih, b_hh,
                               zoneout_rate)
    jax.block_until_ready((h1, c1))
    h1_ref, c1_ref = _reference_cell(x_seq[0], h0, c0, w_ih, w_hh, b_ih, b_hh,
                                     zoneout_rate)
    assert jnp.allclose(h1, h1_ref, atol=1e-4, rtol=1e-4), "hidden mismatch"
    assert jnp.allclose(c1, c1_ref, atol=1e-4, rtol=1e-4), "cell mismatch"

    print("KERNEL_OK")
</pallas_src>

<mosaic_0001>
module attributes {stable_mosaic.version = 11 : i64} {
  func.func @_zoneout_lstm_seq_kernel(%arg0: i32, %arg1: memref<64x16xf32, #tpu.memory_space<vmem>>, %arg2: memref<8x32xf32, #tpu.memory_space<vmem>>, %arg3: memref<8x32xf32, #tpu.memory_space<vmem>>, %arg4: memref<16x128xf32, #tpu.memory_space<vmem>>, %arg5: memref<32x128xf32, #tpu.memory_space<vmem>>, %arg6: memref<1x128xf32, #tpu.memory_space<vmem>>, %arg7: memref<8x8x32xf32, #tpu.memory_space<vmem>>, %arg8: memref<8x8x32xf32, #tpu.memory_space<vmem>>, %arg9: memref<64x128xf32, #tpu.memory_space<vmem>>) attributes {dimension_semantics = [#tpu.dimension_semantics<arbitrary>], iteration_bounds = array<i64: 1>, scalar_prefetch = 0 : i64, scratch_operands = 1 : i64, tpu.core_type = #tpu.core_type<tc>, window_params = [{pipeline_mode = #tpu.pipeline_mode<synchronous>, transform_indices = @transform_0, window_bounds = array<i64: 64, 16>}, {pipeline_mode = #tpu.pipeline_mode<synchronous>, transform_indices = @transform_1, window_bounds = array<i64: 8, 32>}, {pipeline_mode = #tpu.pipeline_mode<synchronous>, transform_indices = @transform_2, window_bounds = array<i64: 8, 32>}, {pipeline_mode = #tpu.pipeline_mode<synchronous>, transform_indices = @transform_3, window_bounds = array<i64: 16, 128>}, {pipeline_mode = #tpu.pipeline_mode<synchronous>, transform_indices = @transform_4, window_bounds = array<i64: 32, 128>}, {pipeline_mode = #tpu.pipeline_mode<synchronous>, transform_indices = @transform_5, window_bounds = array<i64: 1, 128>}, {pipeline_mode = #tpu.pipeline_mode<synchronous>, transform_indices = @transform_6, window_bounds = array<i64: 8, 8, 32>}, {pipeline_mode = #tpu.pipeline_mode<synchronous>, transform_indices = @transform_7, window_bounds = array<i64: 8, 8, 32>}]} {
    %c0 = arith.constant 0 : index
    %c0_0 = arith.constant 0 : index
    %0 = vector.load %arg1[%c0, %c0_0] : memref<64x16xf32, #tpu.memory_space<vmem>>, vector<64x16xf32>
    %c0_1 = arith.constant 0 : index
    %c0_2 = arith.constant 0 : index
    %1 = vector.load %arg4[%c0_1, %c0_2] : memref<16x128xf32, #tpu.memory_space<vmem>>, vector<16x128xf32>
    %cst = arith.constant dense<0.000000e+00> : vector<64x128xf32>
    %2 = tpu.matmul %0, %1, %cst {dimension_numbers = #tpu.dot_dimension_numbers<[1], [0], [0], [1], [0, 0, 1, 1], [], []>} : vector<64x16xf32>, vector<16x128xf32>, vector<64x128xf32> -> vector<64x128xf32>
    %c0_3 = arith.constant 0 : index
    %c0_4 = arith.constant 0 : index
    %3 = vector.load %arg6[%c0_3, %c0_4] : memref<1x128xf32, #tpu.memory_space<vmem>>, vector<1x128xf32>
    %4 = vector.broadcast %3 : vector<1x128xf32> to vector<64x128xf32>
    %5 = arith.addf %2, %4 : vector<64x128xf32>
    %c0_5 = arith.constant 0 : index
    %c0_6 = arith.constant 0 : index
    %6 = vector.load %arg9[%c0_5, %c0_6] : memref<64x128xf32, #tpu.memory_space<vmem>>, vector<64x128xf32>
    tpu.vector_store %arg9[%c0_5, %c0_6], %5 {strides = array<i32>} : memref<64x128xf32, #tpu.memory_space<vmem>>, vector<64x128xf32>,
    %c0_7 = arith.constant 0 : index
    %c0_8 = arith.constant 0 : index
    %7 = vector.load %arg5[%c0_7, %c0_8] : memref<32x128xf32, #tpu.memory_space<vmem>>, vector<32x128xf32>
    %c0_9 = arith.constant 0 : index
    %c0_10 = arith.constant 0 : index
    %8 = vector.load %arg2[%c0_9, %c0_10] : memref<8x32xf32, #tpu.memory_space<vmem>>, vector<8x32xf32>
    %c0_11 = arith.constant 0 : index
    %c0_12 = arith.constant 0 : index
    %9 = vector.load %arg3[%c0_11, %c0_12] : memref<8x32xf32, #tpu.memory_space<vmem>>, vector<8x32xf32>
    %cst_13 = arith.constant 1.000000e-01 : f32
    %c0_i32 = arith.constant 0 : i32
    %c8_i32 = arith.constant 8 : i32
    %10 = arith.muli %c0_i32, %c8_i32 : i32
    %11 = tpu.assume_multiple %10, 8 : i32
    %12 = arith.index_cast %11 : i32 to index
    %c0_14 = arith.constant 0 : index
    %13 = vector.load %arg9[%12, %c0_14] : memref<64x128xf32, #tpu.memory_space<vmem>>, vector<8x128xf32>
    %cst_15 = arith.constant dense<0.000000e+00> : vector<8x128xf32>
    %14 = tpu.matmul %8, %7, %cst_15 {dimension_numbers = #tpu.dot_dimension_numbers<[1], [0], [0], [1], [0, 0, 1, 1], [], []>} : vector<8x32xf32>, vector<32x128xf32>, vector<8x128xf32> -> vector<8x128xf32>
    %15 = arith.addf %13, %14 : vector<8x128xf32>
    %16 = arith.negf %15 : vector<8x128xf32>
    %17 = math.exp %16 : vector<8x128xf32>
    %cst_16 = arith.constant 1.000000e+00 : f32
    %18 = vector.broadcast %cst_16 : f32 to vector<8x128xf32>
    %19 = arith.addf %18, %17 : vector<8x128xf32>
    %20 = arith.divf %18, %19 : vector<8x128xf32>
    %21 = math.tanh %15 : vector<8x128xf32>
    %22 = vector.extract_strided_slice %20 {offsets = [0, 0], sizes = [8, 32], strides = [1, 1]} : vector<8x128xf32> to vector<8x32xf32>
    %23 = vector.extract_strided_slice %20 {offsets = [0, 32], sizes = [8, 32], strides = [1, 1]} : vector<8x128xf32> to vector<8x32xf32>
    %24 = vector.extract_strided_slice %21 {offsets = [0, 64], sizes = [8, 32], strides = [1, 1]} : vector<8x128xf32> to vector<8x32xf32>
    %25 = vector.extract_strided_slice %20 {offsets = [0, 96], sizes = [8, 32], strides = [1, 1]} : vector<8x128xf32> to vector<8x32xf32>
    %26 = arith.mulf %23, %9 : vector<8x32xf32>
    %27 = arith.mulf %22, %24 : vector<8x32xf32>
    %28 = arith.addf %26, %27 : vector<8x32xf32>
    %29 = math.tanh %28 : vector<8x32xf32>
    %30 = arith.mulf %25, %29 : vector<8x32xf32>
    %31 = vector.broadcast %cst_13 : f32 to vector<8x32xf32>
    %32 = arith.mulf %31, %8 : vector<8x32xf32>
    %cst_17 = arith.constant 1.000000e+00 : f32
    %33 = arith.subf %cst_17, %cst_13 : f32
    %34 = vector.broadcast %33 : f32 to vector<8x32xf32>
    %35 = arith.mulf %34, %30 : vector<8x32xf32>
    %36 = arith.addf %32, %35 : vector<8x32xf32>
    %37 = vector.broadcast %cst_13 : f32 to vector<8x32xf32>
    %38 = arith.mulf %37, %9 : vector<8x32xf32>
    %cst_18 = arith.constant 1.000000e+00 : f32
    %39 = arith.subf %cst_18, %cst_13 : f32
    %40 = vector.broadcast %39 : f32 to vector<8x32xf32>
    %41 = arith.mulf %40, %28 : vector<8x32xf32>
    %42 = arith.addf %38, %41 : vector<8x32xf32>
    %43 = arith.index_cast %c0_i32 : i32 to index
    %c0_19 = arith.constant 0 : index
    %c0_20 = arith.constant 0 : index
    %44 = vector.load %arg7[%43, %c0_19, %c0_20] : memref<8x8x32xf32, #tpu.memory_space<vmem>>, vector<1x8x32xf32>
    %45 = vector.shape_cast %44 : vector<1x8x32xf32> to vector<8x32xf32>
    %46 = vector.shape_cast %36 : vector<8x32xf32> to vector<1x8x32xf32>
    tpu.vector_store %arg7[%43, %c0_19, %c0_20], %46 {strides = array<i32>} : memref<8x8x32xf32, #tpu.memory_space<vmem>>, vector<1x8x32xf32>,
    %47 = arith.index_cast %c0_i32 : i32 to index
    %c0_21 = arith.constant 0 : index
    %c0_22 = arith.constant 0 : index
    %48 = vector.load %arg8[%47, %c0_21, %c0_22] : memref<8x8x32xf32, #tpu.memory_space<vmem>>, vector<1x8x32xf32>
    %49 = vector.shape_cast %48 : vector<1x8x32xf32> to vector<8x32xf32>
    %50 = vector.shape_cast %42 : vector<8x32xf32> to vector<1x8x32xf32>
    tpu.vector_store %arg8[%47, %c0_21, %c0_22], %50 {strides = array<i32>} : memref<8x8x32xf32, #tpu.memory_space<vmem>>, vector<1x8x32xf32>,
    %c1_i32 = arith.constant 1 : i32
    %c8_i32_23 = arith.constant 8 : i32
    %51 = arith.muli %c1_i32, %c8_i32_23 : i32
    %52 = tpu.assume_multiple %51, 8 : i32
    %53 = arith.index_cast %52 : i32 to index
    %c0_24 = arith.constant 0 : index
    %54 = vector.load %arg9[%53, %c0_24] : memref<64x128xf32, #tpu.memory_space<vmem>>, vector<8x128xf32>
    %cst_25 = arith.constant dense<0.000000e+00> : vector<8x128xf32>
    %55 = tpu.matmul %36, %7, %cst_25 {dimension_numbers = #tpu.dot_dimension_numbers<[1], [0], [0], [1], [0, 0, 1, 1], [], []>} : vector<8x32xf32>, vector<32x128xf32>, vector<8x128xf32> -> vector<8x128xf32>
    %56 = arith.addf %54, %55 : vector<8x128xf32>
    %57 = arith.negf %56 : vector<8x128xf32>
    %58 = math.exp %57 : vector<8x128xf32>
    %cst_26 = arith.constant 1.000000e+00 : f32
    %59 = vector.broadcast %cst_26 : f32 to vector<8x128xf32>
    %60 = arith.addf %59, %58 : vector<8x128xf32>
    %61 = arith.divf %59, %60 : vector<8x128xf32>
    %62 = math.tanh %56 : vector<8x128xf32>
    %63 = vector.extract_strided_slice %61 {offsets = [0, 0], sizes = [8, 32], strides = [1, 1]} : vector<8x128xf32> to vector<8x32xf32>
    %64 = vector.extract_strided_slice %61 {offsets = [0, 32], sizes = [8, 32], strides = [1, 1]} : vector<8x128xf32> to vector<8x32xf32>
    %65 = vector.extract_strided_slice %62 {offsets = [0, 64], sizes = [8, 32], strides = [1, 1]} : vector<8x128xf32> to vector<8x32xf32>
    %66 = vector.extract_strided_slice %61 {offsets = [0, 96], sizes = [8, 32], strides = [1, 1]} : vector<8x128xf32> to vector<8x32xf32>
    %67 = arith.mulf %64, %42 : vector<8x32xf32>
    %68 = arith.mulf %63, %65 : vector<8x32xf32>
    %69 = arith.addf %67, %68 : vector<8x32xf32>
    %70 = math.tanh %69 : vector<8x32xf32>
    %71 = arith.mulf %66, %70 : vector<8x32xf32>
    %72 = vector.broadcast %cst_13 : f32 to vector<8x32xf32>
    %73 = arith.mulf %72, %36 : vector<8x32xf32>
    %cst_27 = arith.constant 1.000000e+00 : f32
    %74 = arith.subf %cst_27, %cst_13 : f32
    %75 = vector.broadcast %74 : f32 to vector<8x32xf32>
    %76 = arith.mulf %75, %71 : vector<8x32xf32>
    %77 = arith.addf %73, %76 : vector<8x32xf32>
    %78 = vector.broadcast %cst_13 : f32 to vector<8x32xf32>
    %79 = arith.mulf %78, %42 : vector<8x32xf32>
    %cst_28 = arith.constant 1.000000e+00 : f32
    %80 = arith.subf %cst_28, %cst_13 : f32
    %81 = vector.broadcast %80 : f32 to vector<8x32xf32>
    %82 = arith.mulf %81, %69 : vector<8x32xf32>
    %83 = arith.addf %79, %82 : vector<8x32xf32>
    %84 = arith.index_cast %c1_i32 : i32 to index
    %c0_29 = arith.constant 0 : index
    %c0_30 = arith.constant 0 : index
    %85 = vector.load %arg7[%84, %c0_29, %c0_30] : memref<8x8x32xf32, #tpu.memory_space<vmem>>, vector<1x8x32xf32>
    %86 = vector.shape_cast %85 : vector<1x8x32xf32> to vector<8x32xf32>
    %87 = vector.shape_cast %77 : vector<8x32xf32> to vector<1x8x32xf32>
    tpu.vector_store %arg7[%84, %c0_29, %c0_30], %87 {strides = array<i32>} : memref<8x8x32xf32, #tpu.memory_space<vmem>>, vector<1x8x32xf32>,
    %88 = arith.index_cast %c1_i32 : i32 to index
    %c0_31 = arith.constant 0 : index
    %c0_32 = arith.constant 0 : index
    %89 = vector.load %arg8[%88, %c0_31, %c0_32] : memref<8x8x32xf32, #tpu.memory_space<vmem>>, vector<1x8x32xf32>
    %90 = vector.shape_cast %89 : vector<1x8x32xf32> to vector<8x32xf32>
    %91 = vector.shape_cast %83 : vector<8x32xf32> to vector<1x8x32xf32>
    tpu.vector_store %arg8[%88, %c0_31, %c0_32], %91 {strides = array<i32>} : memref<8x8x32xf32, #tpu.memory_space<vmem>>, vector<1x8x32xf32>,
    %c2_i32 = arith.constant 2 : i32
    %c8_i32_33 = arith.constant 8 : i32
    %92 = arith.muli %c2_i32, %c8_i32_33 : i32
    %93 = tpu.assume_multiple %92, 8 : i32
    %94 = arith.index_cast %93 : i32 to index
    %c0_34 = arith.constant 0 : index
    %95 = vector.load %arg9[%94, %c0_34] : memref<64x128xf32, #tpu.memory_space<vmem>>, vector<8x128xf32>
    %cst_35 = arith.constant dense<0.000000e+00> : vector<8x128xf32>
    %96 = tpu.matmul %77, %7, %cst_35 {dimension_numbers = #tpu.dot_dimension_numbers<[1], [0], [0], [1], [0, 0, 1, 1], [], []>} : vector<8x32xf32>, vector<32x128xf32>, vector<8x128xf32> -> vector<8x128xf32>
    %97 = arith.addf %95, %96 : vector<8x128xf32>
    %98 = arith.negf %97 : vector<8x128xf32>
    %99 = math.exp %98 : vector<8x128xf32>
    %cst_36 = arith.constant 1.000000e+00 : f32
    %100 = vector.broadcast %cst_36 : f32 to vector<8x128xf32>
    %101 = arith.addf %100, %99 : vector<8x128xf32>
    %102 = arith.divf %100, %101 : vector<8x128xf32>
    %103 = math.tanh %97 : vector<8x128xf32>
    %104 = vector.extract_strided_slice %102 {offsets = [0, 0], sizes = [8, 32], strides = [1, 1]} : vector<8x128xf32> to vector<8x32xf32>
    %105 = vector.extract_strided_slice %102 {offsets = [0, 32], sizes = [8, 32], strides = [1, 1]} : vector<8x128xf32> to vector<8x32xf32>
    %106 = vector.extract_strided_slice %103 {offsets = [0, 64], sizes = [8, 32], strides = [1, 1]} : vector<8x128xf32> to vector<8x32xf32>
    %107 = vector.extract_strided_slice %102 {offsets = [0, 96], sizes = [8, 32], strides = [1, 1]} : vector<8x128xf32> to vector<8x32xf32>
    %108 = arith.mulf %105, %83 : vector<8x32xf32>
    %109 = arith.mulf %104, %106 : vector<8x32xf32>
    %110 = arith.addf %108, %109 : vector<8x32xf32>
    %111 = math.tanh %110 : vector<8x32xf32>
    %112 = arith.mulf %107, %111 : vector<8x32xf32>
    %113 = vector.broadcast %cst_13 : f32 to vector<8x32xf32>
    %114 = arith.mulf %113, %77 : vector<8x32xf32>
    %cst_37 = arith.constant 1.000000e+00 : f32
    %115 = arith.subf %cst_37, %cst_13 : f32
    %116 = vector.broadcast %115 : f32 to vector<8x32xf32>
    %117 = arith.mulf %116, %112 : vector<8x32xf32>
    %118 = arith.addf %114, %117 : vector<8x32xf32>
    %119 = vector.broadcast %cst_13 : f32 to vector<8x32xf32>
    %120 = arith.mulf %119, %83 : vector<8x32xf32>
    %cst_38 = arith.constant 1.000000e+00 : f32
    %121 = arith.subf %cst_38, %cst_13 : f32
    %122 = vector.broadcast %121 : f32 to vector<8x32xf32>
    %123 = arith.mulf %122, %110 : vector<8x32xf32>
    %124 = arith.addf %120, %123 : vector<8x32xf32>
    %125 = arith.index_cast %c2_i32 : i32 to index
    %c0_39 = arith.constant 0 : index
    %c0_40 = arith.constant 0 : index
    %126 = vector.load %arg7[%125, %c0_39, %c0_40] : memref<8x8x32xf32, #tpu.memory_space<vmem>>, vector<1x8x32xf32>
    %127 = vector.shape_cast %126 : vector<1x8x32xf32> to vector<8x32xf32>
    %128 = vector.shape_cast %118 : vector<8x32xf32> to vector<1x8x32xf32>
    tpu.vector_store %arg7[%125, %c0_39, %c0_40], %128 {strides = array<i32>} : memref<8x8x32xf32, #tpu.memory_space<vmem>>, vector<1x8x32xf32>,
    %129 = arith.index_cast %c2_i32 : i32 to index
    %c0_41 = arith.constant 0 : index
    %c0_42 = arith.constant 0 : index
    %130 = vector.load %arg8[%129, %c0_41, %c0_42] : memref<8x8x32xf32, #tpu.memory_space<vmem>>, vector<1x8x32xf32>
    %131 = vector.shape_cast %130 : vector<1x8x32xf32> to vector<8x32xf32>
    %132 = vector.shape_cast %124 : vector<8x32xf32> to vector<1x8x32xf32>
    tpu.vector_store %arg8[%129, %c0_41, %c0_42], %132 {strides = array<i32>} : memref<8x8x32xf32, #tpu.memory_space<vmem>>, vector<1x8x32xf32>,
    %c3_i32 = arith.constant 3 : i32
    %c8_i32_43 = arith.constant 8 : i32
    %133 = arith.muli %c3_i32, %c8_i32_43 : i32
    %134 = tpu.assume_multiple %133, 8 : i32
    %135 = arith.index_cast %134 : i32 to index
    %c0_44 = arith.constant 0 : index
    %136 = vector.load %arg9[%135, %c0_44] : memref<64x128xf32, #tpu.memory_space<vmem>>, vector<8x128xf32>
    %cst_45 = arith.constant dense<0.000000e+00> : vector<8x128xf32>
    %137 = tpu.matmul %118, %7, %cst_45 {dimension_numbers = #tpu.dot_dimension_numbers<[1], [0], [0], [1], [0, 0, 1, 1], [], []>} : vector<8x32xf32>, vector<32x128xf32>, vector<8x128xf32> -> vector<8x128xf32>
    %138 = arith.addf %136, %137 : vector<8x128xf32>
    %139 = arith.negf %138 : vector<8x128xf32>
    %140 = math.exp %139 : vector<8x128xf32>
    %cst_46 = arith.constant 1.000000e+00 : f32
    %141 = vector.broadcast %cst_46 : f32 to vector<8x128xf32>
    %142 = arith.addf %141, %140 : vector<8x128xf32>
    %143 = arith.divf %141, %142 : vector<8x128xf32>
    %144 = math.tanh %138 : vector<8x128xf32>
    %145 = vector.extract_strided_slice %143 {offsets = [0, 0], sizes = [8, 32], strides = [1, 1]} : vector<8x128xf32> to vector<8x32xf32>
    %146 = vector.extract_strided_slice %143 {offsets = [0, 32], sizes = [8, 32], strides = [1, 1]} : vector<8x128xf32> to vector<8x32xf32>
    %147 = vector.extract_strided_slice %144 {offsets = [0, 64], sizes = [8, 32], strides = [1, 1]} : vector<8x128xf32> to vector<8x32xf32>
    %148 = vector.extract_strided_slice %143 {offsets = [0, 96], sizes = [8, 32], strides = [1, 1]} : vector<8x128xf32> to vector<8x32xf32>
    %149 = arith.mulf %146, %124 : vector<8x32xf32>
    %150 = arith.mulf %145, %147 : vector<8x32xf32>
    %151 = arith.addf %149, %150 : vector<8x32xf32>
    %152 = math.tanh %151 : vector<8x32xf32>
    %153 = arith.mulf %148, %152 : vector<8x32xf32>
    %154 = vector.broadcast %cst_13 : f32 to vector<8x32xf32>
    %155 = arith.mulf %154, %118 : vector<8x32xf32>
    %cst_47 = arith.constant 1.000000e+00 : f32
    %156 = arith.subf %cst_47, %cst_13 : f32
    %157 = vector.broadcast %156 : f32 to vector<8x32xf32>
    %158 = arith.mulf %157, %153 : vector<8x32xf32>
    %159 = arith.addf %155, %158 : vector<8x32xf32>
    %160 = vector.broadcast %cst_13 : f32 to vector<8x32xf32>
    %161 = arith.mulf %160, %124 : vector<8x32xf32>
    %cst_48 = arith.constant 1.000000e+00 : f32
    %162 = arith.subf %cst_48, %cst_13 : f32
    %163 = vector.broadcast %162 : f32 to vector<8x32xf32>
    %164 = arith.mulf %163, %151 : vector<8x32xf32>
    %165 = arith.addf %161, %164 : vector<8x32xf32>
    %166 = arith.index_cast %c3_i32 : i32 to index
    %c0_49 = arith.constant 0 : index
    %c0_50 = arith.constant 0 : index
    %167 = vector.load %arg7[%166, %c0_49, %c0_50] : memref<8x8x32xf32, #tpu.memory_space<vmem>>, vector<1x8x32xf32>
    %168 = vector.shape_cast %167 : vector<1x8x32xf32> to vector<8x32xf32>
    %169 = vector.shape_cast %159 : vector<8x32xf32> to vector<1x8x32xf32>
    tpu.vector_store %arg7[%166, %c0_49, %c0_50], %169 {strides = array<i32>} : memref<8x8x32xf32, #tpu.memory_space<vmem>>, vector<1x8x32xf32>,
    %170 = arith.index_cast %c3_i32 : i32 to index
    %c0_51 = arith.constant 0 : index
    %c0_52 = arith.constant 0 : index
    %171 = vector.load %arg8[%170, %c0_51, %c0_52] : memref<8x8x32xf32, #tpu.memory_space<vmem>>, vector<1x8x32xf32>
    %172 = vector.shape_cast %171 : vector<1x8x32xf32> to vector<8x32xf32>
    %173 = vector.shape_cast %165 : vector<8x32xf32> to vector<1x8x32xf32>
    tpu.vector_store %arg8[%170, %c0_51, %c0_52], %173 {strides = array<i32>} : memref<8x8x32xf32, #tpu.memory_space<vmem>>, vector<1x8x32xf32>,
    %c4_i32 = arith.constant 4 : i32
    %c8_i32_53 = arith.constant 8 : i32
    %174 = arith.muli %c4_i32, %c8_i32_53 : i32
    %175 = tpu.assume_multiple %174, 8 : i32
    %176 = arith.index_cast %175 : i32 to index
    %c0_54 = arith.constant 0 : index
    %177 = vector.load %arg9[%176, %c0_54] : memref<64x128xf32, #tpu.memory_space<vmem>>, vector<8x128xf32>
    %cst_55 = arith.constant dense<0.000000e+00> : vector<8x128xf32>
    %178 = tpu.matmul %159, %7, %cst_55 {dimension_numbers = #tpu.dot_dimension_numbers<[1], [0], [0], [1], [0, 0, 1, 1], [], []>} : vector<8x32xf32>, vector<32x128xf32>, vector<8x128xf32> -> vector<8x128xf32>
    %179 = arith.addf %177, %178 : vector<8x128xf32>
    %180 = arith.negf %179 : vector<8x128xf32>
    %181 = math.exp %180 : vector<8x128xf32>
    %cst_56 = arith.constant 1.000000e+00 : f32
    %182 = vector.broadcast %cst_56 : f32 to vector<8x128xf32>
    %183 = arith.addf %182, %181 : vector<8x128xf32>
    %184 = arith.divf %182, %183 : vector<8x128xf32>
    %185 = math.tanh %179 : vector<8x128xf32>
    %186 = vector.extract_strided_slice %184 {offsets = [0, 0], sizes = [8, 32], strides = [1, 1]} : vector<8x128xf32> to vector<8x32xf32>
    %187 = vector.extract_strided_slice %184 {offsets = [0, 32], sizes = [8, 32], strides = [1, 1]} : vector<8x128xf32> to vector<8x32xf32>
    %188 = vector.extract_strided_slice %185 {offsets = [0, 64], sizes = [8, 32], strides = [1, 1]} : vector<8x128xf32> to vector<8x32xf32>
    %189 = vector.extract_strided_slice %184 {offsets = [0, 96], sizes = [8, 32], strides = [1, 1]} : vector<8x128xf32> to vector<8x32xf32>
    %190 = arith.mulf %187, %165 : vector<8x32xf32>
    %191 = arith.mulf %186, %188 : vector<8x32xf32>
    %192 = arith.addf %190, %191 : vector<8x32xf32>
    %193 = math.tanh %192 : vector<8x32xf32>
    %194 = arith.mulf %189, %193 : vector<8x32xf32>
    %195 = vector.broadcast %cst_13 : f32 to vector<8x32xf32>
    %196 = arith.mulf %195, %159 : vector<8x32xf32>
    %cst_57 = arith.constant 1.000000e+00 : f32
    %197 = arith.subf %cst_57, %cst_13 : f32
    %198 = vector.broadcast %197 : f32 to vector<8x32xf32>
    %199 = arith.mulf %198, %194 : vector<8x32xf32>
    %200 = arith.addf %196, %199 : vector<8x32xf32>
    %201 = vector.broadcast %cst_13 : f32 to vector<8x32xf32>
    %202 = arith.mulf %201, %165 : vector<8x32xf32>
    %cst_58 = arith.constant 1.000000e+00 : f32
    %203 = arith.subf %cst_58, %cst_13 : f32
    %204 = vector.broadcast %203 : f32 to vector<8x32xf32>
    %205 = arith.mulf %204, %192 : vector<8x32xf32>
    %206 = arith.addf %202, %205 : vector<8x32xf32>
    %207 = arith.index_cast %c4_i32 : i32 to index
    %c0_59 = arith.constant 0 : index
    %c0_60 = arith.constant 0 : index
    %208 = vector.load %arg7[%207, %c0_59, %c0_60] : memref<8x8x32xf32, #tpu.memory_space<vmem>>, vector<1x8x32xf32>
    %209 = vector.shape_cast %208 : vector<1x8x32xf32> to vector<8x32xf32>
    %210 = vector.shape_cast %200 : vector<8x32xf32> to vector<1x8x32xf32>
    tpu.vector_store %arg7[%207, %c0_59, %c0_60], %210 {strides = array<i32>} : memref<8x8x32xf32, #tpu.memory_space<vmem>>, vector<1x8x32xf32>,
    %211 = arith.index_cast %c4_i32 : i32 to index
    %c0_61 = arith.constant 0 : index
    %c0_62 = arith.constant 0 : index
    %212 = vector.load %arg8[%211, %c0_61, %c0_62] : memref<8x8x32xf32, #tpu.memory_space<vmem>>, vector<1x8x32xf32>
    %213 = vector.shape_cast %212 : vector<1x8x32xf32> to vector<8x32xf32>
    %214 = vector.shape_cast %206 : vector<8x32xf32> to vector<1x8x32xf32>
    tpu.vector_store %arg8[%211, %c0_61, %c0_62], %214 {strides = array<i32>} : memref<8x8x32xf32, #tpu.memory_space<vmem>>, vector<1x8x32xf32>,
    %c5_i32 = arith.constant 5 : i32
    %c8_i32_63 = arith.constant 8 : i32
    %215 = arith.muli %c5_i32, %c8_i32_63 : i32
    %216 = tpu.assume_multiple %215, 8 : i32
    %217 = arith.index_cast %216 : i32 to index
    %c0_64 = arith.constant 0 : index
    %218 = vector.load %arg9[%217, %c0_64] : memref<64x128xf32, #tpu.memory_space<vmem>>, vector<8x128xf32>
    %cst_65 = arith.constant dense<0.000000e+00> : vector<8x128xf32>
    %219 = tpu.matmul %200, %7, %cst_65 {dimension_numbers = #tpu.dot_dimension_numbers<[1], [0], [0], [1], [0, 0, 1, 1], [], []>} : vector<8x32xf32>, vector<32x128xf32>, vector<8x128xf32> -> vector<8x128xf32>
    %220 = arith.addf %218, %219 : vector<8x128xf32>
    %221 = arith.negf %220 : vector<8x128xf32>
    %222 = math.exp %221 : vector<8x128xf32>
    %cst_66 = arith.constant 1.000000e+00 : f32
    %223 = vector.broadcast %cst_66 : f32 to vector<8x128xf32>
    %224 = arith.addf %223, %222 : vector<8x128xf32>
    %225 = arith.divf %223, %224 : vector<8x128xf32>
    %226 = math.tanh %220 : vector<8x128xf32>
    %227 = vector.extract_strided_slice %225 {offsets = [0, 0], sizes = [8, 32], strides = [1, 1]} : vector<8x128xf32> to vector<8x32xf32>
    %228 = vector.extract_strided_slice %225 {offsets = [0, 32], sizes = [8, 32], strides = [1, 1]} : vector<8x128xf32> to vector<8x32xf32>
    %229 = vector.extract_strided_slice %226 {offsets = [0, 64], sizes = [8, 32], strides = [1, 1]} : vector<8x128xf32> to vector<8x32xf32>
    %230 = vector.extract_strided_slice %225 {offsets = [0, 96], sizes = [8, 32], strides = [1, 1]} : vector<8x128xf32> to vector<8x32xf32>
    %231 = arith.mulf %228, %206 : vector<8x32xf32>
    %232 = arith.mulf %227, %229 : vector<8x32xf32>
    %233 = arith.addf %231, %232 : vector<8x32xf32>
    %234 = math.tanh %233 : vector<8x32xf32>
    %235 = arith.mulf %230, %234 : vector<8x32xf32>
    %236 = vector.broadcast %cst_13 : f32 to vector<8x32xf32>
    %237 = arith.mulf %236, %200 : vector<8x32xf32>
    %cst_67 = arith.constant 1.000000e+00 : f32
    %238 = arith.subf %cst_67, %cst_13 : f32
    %239 = vector.broadcast %238 : f32 to vector<8x32xf32>
    %240 = arith.mulf %239, %235 : vector<8x32xf32>
    %241 = arith.addf %237, %240 : vector<8x32xf32>
    %242 = vector.broadcast %cst_13 : f32 to vector<8x32xf32>
    %243 = arith.mulf %242, %206 : vector<8x32xf32>
    %cst_68 = arith.constant 1.000000e+00 : f32
    %244 = arith.subf %cst_68, %cst_13 : f32
    %245 = vector.broadcast %244 : f32 to vector<8x32xf32>
    %246 = arith.mulf %245, %233 : vector<8x32xf32>
    %247 = arith.addf %243, %246 : vector<8x32xf32>
    %248 = arith.index_cast %c5_i32 : i32 to index
    %c0_69 = arith.constant 0 : index
    %c0_70 = arith.constant 0 : index
    %249 = vector.load %arg7[%248, %c0_69, %c0_70] : memref<8x8x32xf32, #tpu.memory_space<vmem>>, vector<1x8x32xf32>
    %250 = vector.shape_cast %249 : vector<1x8x32xf32> to vector<8x32xf32>
    %251 = vector.shape_cast %241 : vector<8x32xf32> to vector<1x8x32xf32>
    tpu.vector_store %arg7[%248, %c0_69, %c0_70], %251 {strides = array<i32>} : memref<8x8x32xf32, #tpu.memory_space<vmem>>, vector<1x8x32xf32>,
    %252 = arith.index_cast %c5_i32 : i32 to index
    %c0_71 = arith.constant 0 : index
    %c0_72 = arith.constant 0 : index
    %253 = vector.load %arg8[%252, %c0_71, %c0_72] : memref<8x8x32xf32, #tpu.memory_space<vmem>>, vector<1x8x32xf32>
    %254 = vector.shape_cast %253 : vector<1x8x32xf32> to vector<8x32xf32>
    %255 = vector.shape_cast %247 : vector<8x32xf32> to vector<1x8x32xf32>
    tpu.vector_store %arg8[%252, %c0_71, %c0_72], %255 {strides = array<i32>} : memref<8x8x32xf32, #tpu.memory_space<vmem>>, vector<1x8x32xf32>,
    %c6_i32 = arith.constant 6 : i32
    %c8_i32_73 = arith.constant 8 : i32
    %256 = arith.muli %c6_i32, %c8_i32_73 : i32
    %257 = tpu.assume_multiple %256, 8 : i32
    %258 = arith.index_cast %257 : i32 to index
    %c0_74 = arith.constant 0 : index
    %259 = vector.load %arg9[%258, %c0_74] : memref<64x128xf32, #tpu.memory_space<vmem>>, vector<8x128xf32>
    %cst_75 = arith.constant dense<0.000000e+00> : vector<8x128xf32>
    %260 = tpu.matmul %241, %7, %cst_75 {dimension_numbers = #tpu.dot_dimension_numbers<[1], [0], [0], [1], [0, 0, 1, 1], [], []>} : vector<8x32xf32>, vector<32x128xf32>, vector<8x128xf32> -> vector<8x128xf32>
    %261 = arith.addf %259, %260 : vector<8x128xf32>
    %262 = arith.negf %261 : vector<8x128xf32>
    %263 = math.exp %262 : vector<8x128xf32>
    %cst_76 = arith.constant 1.000000e+00 : f32
    %264 = vector.broadcast %cst_76 : f32 to vector<8x128xf32>
    %265 = arith.addf %264, %263 : vector<8x128xf32>
    %266 = arith.divf %264, %265 : vector<8x128xf32>
    %267 = math.tanh %261 : vector<8x128xf32>
    %268 = vector.extract_strided_slice %266 {offsets = [0, 0], sizes = [8, 32], strides = [1, 1]} : vector<8x128xf32> to vector<8x32xf32>
    %269 = vector.extract_strided_slice %266 {offsets = [0, 32], sizes = [8, 32], strides = [1, 1]} : vector<8x128xf32> to vector<8x32xf32>
    %270 = vector.extract_strided_slice %267 {offsets = [0, 64], sizes = [8, 32], strides = [1, 1]} : vector<8x128xf32> to vector<8x32xf32>
    %271 = vector.extract_strided_slice %266 {offsets = [0, 96], sizes = [8, 32], strides = [1, 1]} : vector<8x128xf32> to vector<8x32xf32>
    %272 = arith.mulf %269, %247 : vector<8x32xf32>
    %273 = arith.mulf %268, %270 : vector<8x32xf32>
    %274 = arith.addf %272, %273 : vector<8x32xf32>
    %275 = math.tanh %274 : vector<8x32xf32>
    %276 = arith.mulf %271, %275 : vector<8x32xf32>
    %277 = vector.broadcast %cst_13 : f32 to vector<8x32xf32>
    %278 = arith.mulf %277, %241 : vector<8x32xf32>
    %cst_77 = arith.constant 1.000000e+00 : f32
    %279 = arith.subf %cst_77, %cst_13 : f32
    %280 = vector.broadcast %279 : f32 to vector<8x32xf32>
    %281 = arith.mulf %280, %276 : vector<8x32xf32>
    %282 = arith.addf %278, %281 : vector<8x32xf32>
    %283 = vector.broadcast %cst_13 : f32 to vector<8x32xf32>
    %284 = arith.mulf %283, %247 : vector<8x32xf32>
    %cst_78 = arith.constant 1.000000e+00 : f32
    %285 = arith.subf %cst_78, %cst_13 : f32
    %286 = vector.broadcast %285 : f32 to vector<8x32xf32>
    %287 = arith.mulf %286, %274 : vector<8x32xf32>
    %288 = arith.addf %284, %287 : vector<8x32xf32>
    %289 = arith.index_cast %c6_i32 : i32 to index
    %c0_79 = arith.constant 0 : index
    %c0_80 = arith.constant 0 : index
    %290 = vector.load %arg7[%289, %c0_79, %c0_80] : memref<8x8x32xf32, #tpu.memory_space<vmem>>, vector<1x8x32xf32>
    %291 = vector.shape_cast %290 : vector<1x8x32xf32> to vector<8x32xf32>
    %292 = vector.shape_cast %282 : vector<8x32xf32> to vector<1x8x32xf32>
    tpu.vector_store %arg7[%289, %c0_79, %c0_80], %292 {strides = array<i32>} : memref<8x8x32xf32, #tpu.memory_space<vmem>>, vector<1x8x32xf32>,
    %293 = arith.index_cast %c6_i32 : i32 to index
    %c0_81 = arith.constant 0 : index
    %c0_82 = arith.constant 0 : index
    %294 = vector.load %arg8[%293, %c0_81, %c0_82] : memref<8x8x32xf32, #tpu.memory_space<vmem>>, vector<1x8x32xf32>
    %295 = vector.shape_cast %294 : vector<1x8x32xf32> to vector<8x32xf32>
    %296 = vector.shape_cast %288 : vector<8x32xf32> to vector<1x8x32xf32>
    tpu.vector_store %arg8[%293, %c0_81, %c0_82], %296 {strides = array<i32>} : memref<8x8x32xf32, #tpu.memory_space<vmem>>, vector<1x8x32xf32>,
    %c7_i32 = arith.constant 7 : i32
    %c8_i32_83 = arith.constant 8 : i32
    %297 = arith.muli %c7_i32, %c8_i32_83 : i32
    %298 = tpu.assume_multiple %297, 8 : i32
    %299 = arith.index_cast %298 : i32 to index
    %c0_84 = arith.constant 0 : index
    %300 = vector.load %arg9[%299, %c0_84] : memref<64x128xf32, #tpu.memory_space<vmem>>, vector<8x128xf32>
    %cst_85 = arith.constant dense<0.000000e+00> : vector<8x128xf32>
    %301 = tpu.matmul %282, %7, %cst_85 {dimension_numbers = #tpu.dot_dimension_numbers<[1], [0], [0], [1], [0, 0, 1, 1], [], []>} : vector<8x32xf32>, vector<32x128xf32>, vector<8x128xf32> -> vector<8x128xf32>
    %302 = arith.addf %300, %301 : vector<8x128xf32>
    %303 = arith.negf %302 : vector<8x128xf32>
    %304 = math.exp %303 : vector<8x128xf32>
    %cst_86 = arith.constant 1.000000e+00 : f32
    %305 = vector.broadcast %cst_86 : f32 to vector<8x128xf32>
    %306 = arith.addf %305, %304 : vector<8x128xf32>
    %307 = arith.divf %305, %306 : vector<8x128xf32>
    %308 = math.tanh %302 : vector<8x128xf32>
    %309 = vector.extract_strided_slice %307 {offsets = [0, 0], sizes = [8, 32], strides = [1, 1]} : vector<8x128xf32> to vector<8x32xf32>
    %310 = vector.extract_strided_slice %307 {offsets = [0, 32], sizes = [8, 32], strides = [1, 1]} : vector<8x128xf32> to vector<8x32xf32>
    %311 = vector.extract_strided_slice %308 {offsets = [0, 64], sizes = [8, 32], strides = [1, 1]} : vector<8x128xf32> to vector<8x32xf32>
    %312 = vector.extract_strided_slice %307 {offsets = [0, 96], sizes = [8, 32], strides = [1, 1]} : vector<8x128xf32> to vector<8x32xf32>
    %313 = arith.mulf %310, %288 : vector<8x32xf32>
    %314 = arith.mulf %309, %311 : vector<8x32xf32>
    %315 = arith.addf %313, %314 : vector<8x32xf32>
    %316 = math.tanh %315 : vector<8x32xf32>
    %317 = arith.mulf %312, %316 : vector<8x32xf32>
    %318 = vector.broadcast %cst_13 : f32 to vector<8x32xf32>
    %319 = arith.mulf %318, %282 : vector<8x32xf32>
    %cst_87 = arith.constant 1.000000e+00 : f32
    %320 = arith.subf %cst_87, %cst_13 : f32
    %321 = vector.broadcast %320 : f32 to vector<8x32xf32>
    %322 = arith.mulf %321, %317 : vector<8x32xf32>
    %323 = arith.addf %319, %322 : vector<8x32xf32>
    %324 = vector.broadcast %cst_13 : f32 to vector<8x32xf32>
    %325 = arith.mulf %324, %288 : vector<8x32xf32>
    %cst_88 = arith.constant 1.000000e+00 : f32
    %326 = arith.subf %cst_88, %cst_13 : f32
    %327 = vector.broadcast %326 : f32 to vector<8x32xf32>
    %328 = arith.mulf %327, %315 : vector<8x32xf32>
    %329 = arith.addf %325, %328 : vector<8x32xf32>
    %330 = arith.index_cast %c7_i32 : i32 to index
    %c0_89 = arith.constant 0 : index
    %c0_90 = arith.constant 0 : index
    %331 = vector.load %arg7[%330, %c0_89, %c0_90] : memref<8x8x32xf32, #tpu.memory_space<vmem>>, vector<1x8x32xf32>
    %332 = vector.shape_cast %331 : vector<1x8x32xf32> to vector<8x32xf32>
    %333 = vector.shape_cast %323 : vector<8x32xf32> to vector<1x8x32xf32>
    tpu.vector_store %arg7[%330, %c0_89, %c0_90], %333 {strides = array<i32>} : memref<8x8x32xf32, #tpu.memory_space<vmem>>, vector<1x8x32xf32>,
    %334 = arith.index_cast %c7_i32 : i32 to index
    %c0_91 = arith.constant 0 : index
    %c0_92 = arith.constant 0 : index
    %335 = vector.load %arg8[%334, %c0_91, %c0_92] : memref<8x8x32xf32, #tpu.memory_space<vmem>>, vector<1x8x32xf32>
    %336 = vector.shape_cast %335 : vector<1x8x32xf32> to vector<8x32xf32>
    %337 = vector.shape_cast %329 : vector<8x32xf32> to vector<1x8x32xf32>
    tpu.vector_store %arg8[%334, %c0_91, %c0_92], %337 {strides = array<i32>} : memref<8x8x32xf32, #tpu.memory_space<vmem>>, vector<1x8x32xf32>,
    %c8_i32_93 = arith.constant 8 : i32
    return
  }
  func.func @transform_0(%arg0: i32) -> (i32, i32) {
    %c0_i32 = arith.constant 0 : i32
    %c0_i32_0 = arith.constant 0 : i32
    %c0_i32_1 = arith.constant 0 : i32
    return %c0_i32, %c0_i32_0 : i32, i32
  }
  func.func @transform_1(%arg0: i32) -> (i32, i32) {
    %c0_i32 = arith.constant 0 : i32
    %c0_i32_0 = arith.constant 0 : i32
    %c0_i32_1 = arith.constant 0 : i32
    return %c0_i32, %c0_i32_0 : i32, i32
  }
  func.func @transform_2(%arg0: i32) -> (i32, i32) {
    %c0_i32 = arith.constant 0 : i32
    %c0_i32_0 = arith.constant 0 : i32
    %c0_i32_1 = arith.constant 0 : i32
    return %c0_i32, %c0_i32_0 : i32, i32
  }
  func.func @transform_3(%arg0: i32) -> (i32, i32) {
    %c0_i32 = arith.constant 0 : i32
    %c0_i32_0 = arith.constant 0 : i32
    %c0_i32_1 = arith.constant 0 : i32
    return %c0_i32, %c0_i32_0 : i32, i32
  }
  func.func @transform_4(%arg0: i32) -> (i32, i32) {
    %c0_i32 = arith.constant 0 : i32
    %c0_i32_0 = arith.constant 0 : i32
    %c0_i32_1 = arith.constant 0 : i32
    return %c0_i32, %c0_i32_0 : i32, i32
  }
  func.func @transform_5(%arg0: i32) -> (i32, i32) {
    %c0_i32 = arith.constant 0 : i32
    %c0_i32_0 = arith.constant 0 : i32
    %c0_i32_1 = arith.constant 0 : i32
    return %c0_i32, %c0_i32_0 : i32, i32
  }
  func.func @transform_6(%arg0: i32) -> (i32, i32, i32) {
    %c0_i32 = arith.constant 0 : i32
    %c0_i32_0 = arith.constant 0 : i32
    %c0_i32_1 = arith.constant 0 : i32
    %c0_i32_2 = arith.constant 0 : i32
    return %c0_i32, %c0_i32_0, %c0_i32_1 : i32, i32, i32
  }
  func.func @transform_7(%arg0: i32) -> (i32, i32, i32) {
    %c0_i32 = arith.constant 0 : i32
    %c0_i32_0 = arith.constant 0 : i32
    %c0_i32_1 = arith.constant 0 : i32
    %c0_i32_2 = arith.constant 0 : i32
    return %c0_i32, %c0_i32_0, %c0_i32_1 : i32, i32, i32
  }
}

</mosaic_0001>

<llo_original>
// kernel: tpu_custom_call.1
$region0: #{tpu_custom_call.1}
  #allocation0 [shape = 'u32[]', space=smem, size = 0x4, offset = 0x4, fixed_abs, tag = 'smem constant byte address 0x4 - core index']
  #allocation1 [shape = 'u32[144,128]{1,0:T(1,128)}', space=vmem, size = 0x12000, scoped, tag = 'internal scratch']
  #allocation2 [shape = 'f32[64,128]{1,0:T(8,128)}', space=vmem, size = 0x8000, scoped, tag = 'scratch operand']
  %s0 = inlined_call_operand.vmem [shape: f32[64,16], index: 0, kind: input, shape index: {}]
  %s1 = inlined_call_operand.vmem [shape: f32[8,32], index: 1, kind: input, shape index: {}]
  %s2 = inlined_call_operand.vmem [shape: f32[8,32], index: 2, kind: input, shape index: {}]
  %s3 = inlined_call_operand.vmem [shape: f32[16,128], index: 3, kind: input, shape index: {}]
  %s4 = inlined_call_operand.vmem [shape: f32[32,128], index: 4, kind: input, shape index: {}]
  %s5 = inlined_call_operand.vmem [shape: f32[1,128], index: 5, kind: input, shape index: {}]
  %s6 = inlined_call_operand.hbm [shape: f32[8,8,32], index: 6, kind: output, shape index: {0}]
  %s7 = inlined_call_operand.hbm [shape: f32[8,8,32], index: 7, kind: output, shape index: {1}]
  %8 = xla_tuple %s6, %s7
  %s9 = sld [smem:[#allocation0]]
  $region42: #{tpu_custom_call.1} parent=0
    _
  %s11 = ssub.s32 1, %s9
  %s12 = scalar_select 0, %s11, %s9
  $region1: #{tpu_custom_call.1} parent=0
    #allocation3 [shape = 'u8[32768]{0}', space=vmem, size = 0x8000, scoped, tag = 'output window, operand 0, single buffered']
    #allocation4 [shape = 's32[1]{0}', space=sflag, size = 0x4, scoped, tag = 'scoped memory for tpu_custom_call.1']
    #allocation5 [shape = 'u8[32768]{0}', space=vmem, size = 0x8000, scoped, tag = 'output window, operand 1, single buffered']
    #allocation6 [shape = 's32[1]{0}', space=sflag, size = 0x4, scoped, tag = 'scoped memory for tpu_custom_call.1']
    %13 = vsyncpa [#allocation4], 0
    %14 = vsyncpa [#allocation6], 0
    // Predicated region
    $region2: #{tpu_custom_call.1} parent=1 // pred_check
      _
    $region3: #{tpu_custom_call.1} parent=1 // pred_check_branch
      %16 = sbr.rel (0) target = $region5
    $region4: #{tpu_custom_call.1} parent=1 // pred_region
      _
    $region5: #{tpu_custom_call.1} parent=1 // pred_fallthru
      _
    // Predicated region
    $region6: #{tpu_custom_call.1} parent=1 // pred_check
      _
    $region7: #{tpu_custom_call.1} parent=1 // pred_check_branch
      %18 = sbr.rel (0) target = $region9
    $region8: #{tpu_custom_call.1} parent=1 // pred_region
      _
    $region9: #{tpu_custom_call.1} parent=1 // pred_fallthru
      _
    // Predicated region
    $region10: #{tpu_custom_call.1} parent=1 // pred_check
      _
    $region11: #{tpu_custom_call.1} parent=1 // pred_check_branch
      %20 = sbr.rel (0) target = $region13
    $region12: #{tpu_custom_call.1} parent=1 // pred_region
      _
    $region13: #{tpu_custom_call.1} parent=1 // pred_fallthru
      _
    // Predicated region
    $region14: #{tpu_custom_call.1} parent=1 // pred_check
      _
    $region15: #{tpu_custom_call.1} parent=1 // pred_check_branch
      %22 = sbr.rel (0) target = $region17
    $region16: #{tpu_custom_call.1} parent=1 // pred_region
      _
    $region17: #{tpu_custom_call.1} parent=1 // pred_fallthru
      _
    // Predicated region
    $region18: #{tpu_custom_call.1} parent=1 // pred_check
      _
    $region19: #{tpu_custom_call.1} parent=1 // pred_check_branch
      %24 = sbr.rel (0) target = $region21
    $region20: #{tpu_custom_call.1} parent=1 // pred_region
      _
    $region21: #{tpu_custom_call.1} parent=1 // pred_fallthru
      _
    // Predicated region
    $region22: #{tpu_custom_call.1} parent=1 // pred_check
      _
    $region23: #{tpu_custom_call.1} parent=1 // pred_check_branch
      %26 = sbr.rel (0) target = $region25
    $region24: #{tpu_custom_call.1} parent=1 // pred_region
      _
    $region25: #{tpu_custom_call.1} parent=1 // pred_fallthru
      _
    %v27 = vld [vmem:[%s0] sm:$0xff]
    %v28 = vld [vmem:[%s0 + $0x8] sm:$0xff]
    %v29 = vld [vmem:[%s0 + $0x10] sm:$0xff]
    %v30 = vld [vmem:[%s0 + $0x18] sm:$0xff]
    %v31 = vld [vmem:[%s0 + $0x20] sm:$0xff]
    %v32 = vld [vmem:[%s0 + $0x28] sm:$0xff]
    %v33 = vld [vmem:[%s0 + $0x30] sm:$0xff]
    %v34 = vld [vmem:[%s0 + $0x38] sm:$0xff]
    %v35 = vld [vmem:[%s3] sm:$0xff]
    %v36 = vld [vmem:[%s3 + $0x8] sm:$0xff]
    %v37 = vld [vmem:[%s5] sm:$0x1]
    %v39 = vlaneseq
    %v40 = vshrl.u32 %v39, 7
    %v41 = vsub.s32 0, %v40
    %v42 = vrot.slane %v37, %v41
    %vm44 = vcmask 130048
    %v46 = vsel %vm44, %v27, 0
    %v49 = vsel %vm44, %v28, 0
    %v52 = vsel %vm44, %v29, 0
    %v55 = vsel %vm44, %v30, 0
    %v58 = vsel %vm44, %v31, 0
    %v61 = vsel %vm44, %v32, 0
    %v64 = vsel %vm44, %v33, 0
    %v67 = vsel %vm44, %v34, 0
    %69 = vmatprep.subr.mxu0 0.0
    %70 = vmatpush1.msra.mxu0 %v35
    %71 = vmatprep.subr.mxu0 0.0
    %72 = vmatpush1.msra.mxu0 %v36
    %73 = vmatprep.subr.mxu0 0.0
    %74 = vmatpush1.msra.mxu0 0.0
    %75 = vmatprep.subr.mxu0 0.0
    %76 = vmatpush1.msra.mxu0 0.0
    %77 = vmatprep.subr.mxu0 0.0
    %78 = vmatpush1.msra.mxu0 0.0
    %79 = vmatprep.subr.mxu0 0.0
    %80 = vmatpush1.msra.mxu0 0.0
    %81 = vmatprep.subr.mxu0 0.0
    %82 = vmatpush1.msra.mxu0 0.0
    %83 = vmatprep.subr.mxu0 0.0
    %84 = vmatpush1.msra.mxu0 0.0
    %85 = vmatprep.subr.mxu0 0.0
    %86 = vmatpush1.msra.mxu0 0.0
    %87 = vmatprep.subr.mxu0 0.0
    %88 = vmatpush1.msra.mxu0 0.0
    %89 = vmatprep.subr.mxu0 0.0
    %90 = vmatpush1.msra.mxu0 0.0
    %91 = vmatprep.subr.mxu0 0.0
    %92 = vmatpush1.msra.mxu0 0.0
    %93 = vmatprep.subr.mxu0 0.0
    %94 = vmatpush1.msra.mxu0 0.0
    %95 = vmatprep.subr.mxu0 0.0
    %96 = vmatpush1.msra.mxu0 0.0
    %97 = vmatprep.subr.mxu0 0.0
    %98 = vmatpush1.msra.mxu0 0.0
    %99 = vmatprep.subr.mxu0 0.0
    %100 = vmatpush1.msra.mxu0 0.0
    %101 = vmatprep.subr.mxu0 0.0
    %102 = vmatpush1.msra.mxu0 0.0
    %103 = vmatprep.subr.mxu0 0.0
    %104 = vmatpush1.msra.mxu0 0.0
    %105 = vmatprep.subr.mxu0 0.0
    %106 = vmatpush1.msra.mxu0 0.0
    %107 = vmatprep.subr.mxu0 0.0
    %108 = vmatpush1.msra.mxu0 0.0
    %109 = vmatprep.subr.mxu0 0.0
    %110 = vmatpush1.msra.mxu0 0.0
    %111 = vmatprep.subr.mxu0 0.0
    %112 = vmatpush1.msra.mxu0 0.0
    %113 = vmatprep.subr.mxu0 0.0
    %114 = vmatpush1.msra.mxu0 0.0
    %115 = vmatprep.subr.mxu0 0.0
    %116 = vmatpush1.msra.mxu0 0.0
    %117 = vmatprep.subr.mxu0 0.0
    %118 = vmatpush1.msra.mxu0 0.0
    %119 = vmatprep.subr.mxu0 0.0
    %120 = vmatpush1.msra.mxu0 0.0
    %121 = vmatprep.subr.mxu0 0.0
    %122 = vmatpush1.msra.mxu0 0.0
    %123 = vmatprep.subr.mxu0 0.0
    %124 = vmatpush1.msra.mxu0 0.0
    %125 = vmatprep.subr.mxu0 0.0
    %126 = vmatpush1.msra.mxu0 0.0
    %127 = vmatprep.subr.mxu0 0.0
    %128 = vmatpush1.msra.mxu0 0.0
    %129 = vmatprep.subr.mxu0 0.0
    %130 = vmatpush1.msra.mxu0 0.0
    %131 = vmatprep.subr.mxu0 0.0
    %132 = vmatpush1.msra.mxu0 0.0
    %133 = vmatprep.mubr.f32.mxu0 0.0
    %134 = vmatmul.mubr.f32.gmra.mrb[0].mxu0 %v46
    %v135 = vpop.f32.mrb[0].mxu0
    %v136 = vadd.f32 %v42, %v135
    %v137 = vpop.f32.mrb[0].mxu0
    %138 = vmatprep.mubr.f32.mxu0 0.0
    %139 = vmatmul.mubr.f32.gmra.mrb[0].mxu0 %v49
    %v140 = vpop.f32.mrb[0].mxu0
    %v141 = vadd.f32 %v42, %v140
    %v142 = vpop.f32.mrb[0].mxu0
    %143 = vmatprep.mubr.f32.mxu0 0.0
    %144 = vmatmul.mubr.f32.gmra.mrb[0].mxu0 %v52
    %v145 = vpop.f32.mrb[0].mxu0
    %v146 = vadd.f32 %v42, %v145
    %v147 = vpop.f32.mrb[0].mxu0
    %148 = vmatprep.mubr.f32.mxu0 0.0
    %149 = vmatmul.mubr.f32.gmra.mrb[0].mxu0 %v55
    %v150 = vpop.f32.mrb[0].mxu0
    %v151 = vadd.f32 %v42, %v150
    %v152 = vpop.f32.mrb[0].mxu0
    %153 = vmatprep.mubr.f32.mxu0 0.0
    %154 = vmatmul.mubr.f32.gmra.mrb[0].mxu0 %v58
    %v155 = vpop.f32.mrb[0].mxu0
    %v156 = vadd.f32 %v42, %v155
    %v157 = vpop.f32.mrb[0].mxu0
    %158 = vmatprep.mubr.f32.mxu0 0.0
    %159 = vmatmul.mubr.f32.gmra.mrb[0].mxu0 %v61
    %v160 = vpop.f32.mrb[0].mxu0
    %v161 = vadd.f32 %v42, %v160
    %v162 = vpop.f32.mrb[0].mxu0
    %163 = vmatprep.mubr.f32.mxu0 0.0
    %164 = vmatmul.mubr.f32.gmra.mrb[0].mxu0 %v64
    %v165 = vpop.f32.mrb[0].mxu0
    %v166 = vadd.f32 %v42, %v165
    %v167 = vpop.f32.mrb[0].mxu0
    %168 = vmatprep.mubr.f32.mxu0 0.0
    %169 = vmatmul.mubr.f32.gmra.mrb[0].mxu0 %v67
    %v170 = vpop.f32.mrb[0].mxu0
    %v171 = vadd.f32 %v42, %v170
    %v172 = vpop.f32.mrb[0].mxu0
    %173 = vdwg.mxu0
    %174 = vst [vmem:[#allocation2] sm:$0xff] %v136
    %175 = vst [vmem:[#allocation2 + $0x8] sm:$0xff] %v141
    %176 = vst [vmem:[#allocation2 + $0x10] sm:$0xff] %v146
    %177 = vst [vmem:[#allocation2 + $0x18] sm:$0xff] %v151
    %178 = vst [vmem:[#allocation2 + $0x20] sm:$0xff] %v156
    %179 = vst [vmem:[#allocation2 + $0x28] sm:$0xff] %v161
    %180 = vst [vmem:[#allocation2 + $0x30] sm:$0xff] %v166
    %181 = vst [vmem:[#allocation2 + $0x38] sm:$0xff] %v171
    %v182 = vld [vmem:[%s4] sm:$0xff]
    %v183 = vld [vmem:[%s4 + $0x8] sm:$0xff]
    %v184 = vld [vmem:[%s4 + $0x10] sm:$0xff]
    %v185 = vld [vmem:[%s4 + $0x18] sm:$0xff]
    %v186 = vld [vmem:[%s1] sm:$0xff]
    %v187 = vld [vmem:[%s2] sm:$0xff]
    %v188 = vld [vmem:[#allocation2] sm:$0xff]
    %vm189 = vcmask 261120
    %v191 = vsel %vm189, %v186, 0
    %193 = vmatprep.subr.mxu0 0.0
    %194 = vmatpush1.msra.mxu0 %v182
    %195 = vmatprep.subr.mxu0 0.0
    %196 = vmatpush1.msra.mxu0 %v183
    %197 = vmatprep.subr.mxu0 0.0
    %198 = vmatpush1.msra.mxu0 %v184
    %199 = vmatprep.subr.mxu0 0.0
    %200 = vmatpush1.msra.mxu0 %v185
    %201 = vmatprep.subr.mxu0 0.0
    %202 = vmatpush1.msra.mxu0 0.0
    %203 = vmatprep.subr.mxu0 0.0
    %204 = vmatpush1.msra.mxu0 0.0
    %205 = vmatprep.subr.mxu0 0.0
    %206 = vmatpush1.msra.mxu0 0.0
    %207 = vmatprep.subr.mxu0 0.0
    %208 = vmatpush1.msra.mxu0 0.0
    %209 = vmatprep.subr.mxu0 0.0
    %210 = vmatpush1.msra.mxu0 0.0
    %211 = vmatprep.subr.mxu0 0.0
    %212 = vmatpush1.msra.mxu0 0.0
    %213 = vmatprep.subr.mxu0 0.0
    %214 = vmatpush1.msra.mxu0 0.0
    %215 = vmatprep.subr.mxu0 0.0
    %216 = vmatpush1.msra.mxu0 0.0
    %217 = vmatprep.subr.mxu0 0.0
    %218 = vmatpush1.msra.mxu0 0.0
    %219 = vmatprep.subr.mxu0 0.0
    %220 = vmatpush1.msra.mxu0 0.0
    %221 = vmatprep.subr.mxu0 0.0
    %222 = vmatpush1.msra.mxu0 0.0
    %223 = vmatprep.subr.mxu0 0.0
    %224 = vmatpush1.msra.mxu0 0.0
    %225 = vmatprep.subr.mxu0 0.0
    %226 = vmatpush1.msra.mxu0 0.0
    %227 = vmatprep.subr.mxu0 0.0
    %228 = vmatpush1.msra.mxu0 0.0
    %229 = vmatprep.subr.mxu0 0.0
    %230 = vmatpush1.msra.mxu0 0.0
    %231 = vmatprep.subr.mxu0 0.0
    %232 = vmatpush1.msra.mxu0 0.0
    %233 = vmatprep.subr.mxu0 0.0
    %234 = vmatpush1.msra.mxu0 0.0
    %235 = vmatprep.subr.mxu0 0.0
    %236 = vmatpush1.msra.mxu0 0.0
    %237 = vmatprep.subr.mxu0 0.0
    %238 = vmatpush1.msra.mxu0 0.0
    %239 = vmatprep.subr.mxu0 0.0
    %240 = vmatpush1.msra.mxu0 0.0
    %241 = vmatprep.subr.mxu0 0.0
    %242 = vmatpush1.msra.mxu0 0.0
    %243 = vmatprep.subr.mxu0 0.0
    %244 = vmatpush1.msra.mxu0 0.0
    %245 = vmatprep.subr.mxu0 0.0
    %246 = vmatpush1.msra.mxu0 0.0
    %247 = vmatprep.subr.mxu0 0.0
    %248 = vmatpush1.msra.mxu0 0.0
    %249 = vmatprep.subr.mxu0 0.0
    %250 = vmatpush1.msra.mxu0 0.0
    %251 = vmatprep.subr.mxu0 0.0
    %252 = vmatpush1.msra.mxu0 0.0
    %253 = vmatprep.subr.mxu0 0.0
    %254 = vmatpush1.msra.mxu0 0.0
    %255 = vmatprep.subr.mxu0 0.0
    %256 = vmatpush1.msra.mxu0 0.0
    %257 = vmatprep.mubr.f32.mxu0 0.0
    %258 = vmatmul.mubr.f32.gmra.mrb[0].mxu0 %v191
    %v259 = vpop.f32.mrb[0].mxu0
    %v260 = vadd.f32 0.0, %v259
    %v261 = vpop.f32.mrb[0].mxu0
    %262 = vdwg.mxu0
    %v263 = vadd.f32 %v188, %v260
    %v264 = vxor.u32 %v263, 2147483648
    %v265 = vmul.f32 %v264, 1.442695
    %v266 = vpow.pop %v265
    %v267 = vadd.f32 %v266, 1.0
    %v268 = vrcp.pop %v267
    %v269 = vmul.f32 1.0, %v268
    %v270 = vtanh.pop %v263
    %272 = vrot.lane.b32.xlu0 %v187, 32
    %v273 = vpop.permute.xlu0 %272
    %v275 = vmul.f32 %v269, %v273
    %277 = vrot.lane.b32.xlu0 %v270, 64
    %v278 = vpop.permute.xlu0 %277
    %v280 = vmul.f32 %v269, %v278
    %282 = vrot.lane.b32.xlu0 %v280, 32
    %v283 = vpop.permute.xlu0 %282
    %v285 = vadd.f32 %v275, %v283
    %v286 = vtanh.pop %v285
    %288 = vrot.lane.b32.xlu0 %v286, 64
    %v289 = vpop.permute.xlu0 %288
    %v291 = vmul.f32 %v269, %v289
    %v292 = vmul.f32 %v186, 0.1
    %v293 = vmul.f32 %v291, 0.9
    %295 = vrot.lane.b32.xlu0 %v293, 32
    %v296 = vpop.permute.xlu0 %295
    %v298 = vadd.f32 %v292, %v296
    %v299 = vmul.f32 %v187, 0.1
    %v300 = vmul.f32 %v285, 0.9
    %302 = vrot.lane.b32.xlu0 %v300, 96
    %v303 = vpop.permute.xlu0 %302
    %v305 = vadd.f32 %v299, %v303
    %306 = vst.msk [vmem:[#allocation3] sm:$0xff] %vm189, %v298
    %307 = vst.msk [vmem:[#allocation5] sm:$0xff] %vm189, %v305
    %s308 = scalar_lea.vmem [#allocation2], 8
    %v309 = vld [vmem:[%s308] sm:$0xff]
    %v311 = vsel %vm189, %v298, 0
    %313 = vmatprep.subr.mxu0 0.0
    %314 = vmatpush1.msra.mxu0 %v182
    %315 = vmatprep.subr.mxu0 0.0
    %316 = vmatpush1.msra.mxu0 %v183
    %317 = vmatprep.subr.mxu0 0.0
    %318 = vmatpush1.msra.mxu0 %v184
    %319 = vmatprep.subr.mxu0 0.0
    %320 = vmatpush1.msra.mxu0 %v185
    %321 = vmatprep.subr.mxu0 0.0
    %322 = vmatpush1.msra.mxu0 0.0
    %323 = vmatprep.subr.mxu0 0.0
    %324 = vmatpush1.msra.mxu0 0.0
    %325 = vmatprep.subr.mxu0 0.0
    %326 = vmatpush1.msra.mxu0 0.0
    %327 = vmatprep.subr.mxu0 0.0
    %328 = vmatpush1.msra.mxu0 0.0
    %329 = vmatprep.subr.mxu0 0.0
    %330 = vmatpush1.msra.mxu0 0.0
    %331 = vmatprep.subr.mxu0 0.0
    %332 = vmatpush1.msra.mxu0 0.0
    %333 = vmatprep.subr.mxu0 0.0
    %334 = vmatpush1.msra.mxu0 0.0
    %335 = vmatprep.subr.mxu0 0.0
    %336 = vmatpush1.msra.mxu0 0.0
    %337 = vmatprep.subr.mxu0 0.0
    %338 = vmatpush1.msra.mxu0 0.0
    %339 = vmatprep.subr.mxu0 0.0
    %340 = vmatpush1.msra.mxu0 0.0
    %341 = vmatprep.subr.mxu0 0.0
    %342 = vmatpush1.msra.mxu0 0.0
    %343 = vmatprep.subr.mxu0 0.0
    %344 = vmatpush1.msra.mxu0 0.0
    %345 = vmatprep.subr.mxu0 0.0
    %346 = vmatpush1.msra.mxu0 0.0
    %347 = vmatprep.subr.mxu0 0.0
    %348 = vmatpush1.msra.mxu0 0.0
    %349 = vmatprep.subr.mxu0 0.0
    %350 = vmatpush1.msra.mxu0 0.0
    %351 = vmatprep.subr.mxu0 0.0
    %352 = vmatpush1.msra.mxu0 0.0
    %353 = vmatprep.subr.mxu0 0.0
    %354 = vmatpush1.msra.mxu0 0.0
    %355 = vmatprep.subr.mxu0 0.0
    %356 = vmatpush1.msra.mxu0 0.0
    %357 = vmatprep.subr.mxu0 0.0
    %358 = vmatpush1.msra.mxu0 0.0
    %359 = vmatprep.subr.mxu0 0.0
    %360 = vmatpush1.msra.mxu0 0.0
    %361 = vmatprep.subr.mxu0 0.0
    %362 = vmatpush1.msra.mxu0 0.0
    %363 = vmatprep.subr.mxu0 0.0
    %364 = vmatpush1.msra.mxu0 0.0
    %365 = vmatprep.subr.mxu0 0.0
    %366 = vmatpush1.msra.mxu0 0.0
    %367 = vmatprep.subr.mxu0 0.0
    %368 = vmatpush1.msra.mxu0 0.0
    %369 = vmatprep.subr.mxu0 0.0
    %370 = vmatpush1.msra.mxu0 0.0
    %371 = vmatprep.subr.mxu0 0.0
    %372 = vmatpush1.msra.mxu0 0.0
    %373 = vmatprep.subr.mxu0 0.0
    %374 = vmatpush1.msra.mxu0 0.0
    %375 = vmatprep.subr.mxu0 0.0
    %376 = vmatpush1.msra.mxu0 0.0
    %377 = vmatprep.mubr.f32.mxu0 0.0
    %378 = vmatmul.mubr.f32.gmra.mrb[0].mxu0 %v311
    %v379 = vpop.f32.mrb[0].mxu0
    %v380 = vadd.f32 0.0, %v379
    %v381 = vpop.f32.mrb[0].mxu0
    %382 = vdwg.mxu0
    %v383 = vadd.f32 %v309, %v380
    %v384 = vxor.u32 %v383, 2147483648
    %v385 = vmul.f32 %v384, 1.442695
    %v386 = vpow.pop %v385
    %v387 = vadd.f32 %v386, 1.0
    %v388 = vrcp.pop %v387
    %v389 = vmul.f32 1.0, %v388
    %v390 = vtanh.pop %v383
    %392 = vrot.lane.b32.xlu0 %v305, 32
    %v393 = vpop.permute.xlu0 %392
    %v395 = vmul.f32 %v389, %v393
    %397 = vrot.lane.b32.xlu0 %v390, 64
    %v398 = vpop.permute.xlu0 %397
    %v400 = vmul.f32 %v389, %v398
    %402 = vrot.lane.b32.xlu0 %v400, 32
    %v403 = vpop.permute.xlu0 %402
    %v405 = vadd.f32 %v395, %v403
    %v406 = vtanh.pop %v405
    %408 = vrot.lane.b32.xlu0 %v406, 64
    %v409 = vpop.permute.xlu0 %408
    %v411 = vmul.f32 %v389, %v409
    %v412 = vmul.f32 %v298, 0.1
    %v413 = vmul.f32 %v411, 0.9
    %415 = vrot.lane.b32.xlu0 %v413, 32
    %v416 = vpop.permute.xlu0 %415
    %v418 = vadd.f32 %v412, %v416
    %v419 = vmul.f32 %v305, 0.1
    %v420 = vmul.f32 %v405, 0.9
    %422 = vrot.lane.b32.xlu0 %v420, 96
    %v423 = vpop.permute.xlu0 %422
    %v425 = vadd.f32 %v419, %v423
    %s426 = scalar_lea.vmem [#allocation3], 8
    %427 = vst.msk [vmem:[%s426] sm:$0xff] %vm189, %v418
    %s428 = scalar_lea.vmem [#allocation5], 8
    %429 = vst.msk [vmem:[%s428] sm:$0xff] %vm189, %v425
    %s430 = scalar_lea.vmem [#allocation2], 16
    %v431 = vld [vmem:[%s430] sm:$0xff]
    %v433 = vsel %vm189, %v418, 0
    %435 = vmatprep.subr.mxu0 0.0
    %436 = vmatpush1.msra.mxu0 %v182
    %437 = vmatprep.subr.mxu0 0.0
    %438 = vmatpush1.msra.mxu0 %v183
    %439 = vmatprep.subr.mxu0 0.0
    %440 = vmatpush1.msra.mxu0 %v184
    %441 = vmatprep.subr.mxu0 0.0
    %442 = vmatpush1.msra.mxu0 %v185
    %443 = vmatprep.subr.mxu0 0.0
    %444 = vmatpush1.msra.mxu0 0.0
    %445 = vmatprep.subr.mxu0 0.0
    %446 = vmatpush1.msra.mxu0 0.0
    %447 = vmatprep.subr.mxu0 0.0
    %448 = vmatpush1.msra.mxu0 0.0
    %449 = vmatprep.subr.mxu0 0.0
    %450 = vmatpush1.msra.mxu0 0.0
    %451 = vmatprep.subr.mxu0 0.0
    %452 = vmatpush1.msra.mxu0 0.0
    %453 = vmatprep.subr.mxu0 0.0
    %454 = vmatpush1.msra.mxu0 0.0
    %455 = vmatprep.subr.mxu0 0.0
    %456 = vmatpush1.msra.mxu0 0.0
    %457 = vmatprep.subr.mxu0 0.0
    %458 = vmatpush1.msra.mxu0 0.0
    %459 = vmatprep.subr.mxu0 0.0
    %460 = vmatpush1.msra.mxu0 0.0
    %461 = vmatprep.subr.mxu0 0.0
    %462 = vmatpush1.msra.mxu0 0.0
    %463 = vmatprep.subr.mxu0 0.0
    %464 = vmatpush1.msra.mxu0 0.0
    %465 = vmatprep.subr.mxu0 0.0
    %466 = vmatpush1.msra.mxu0 0.0
    %467 = vmatprep.subr.mxu0 0.0
    %468 = vmatpush1.msra.mxu0 0.0
    %469 = vmatprep.subr.mxu0 0.0
    %470 = vmatpush1.msra.mxu0 0.0
    %471 = vmatprep.subr.mxu0 0.0
    %472 = vmatpush1.msra.mxu0 0.0
    %473 = vmatprep.subr.mxu0 0.0
    %474 = vmatpush1.msra.mxu0 0.0
    %475 = vmatprep.subr.mxu0 0.0
    %476 = vmatpush1.msra.mxu0 0.0
    %477 = vmatprep.subr.mxu0 0.0
    %478 = vmatpush1.msra.mxu0 0.0
    %479 = vmatprep.subr.mxu0 0.0
    %480 = vmatpush1.msra.mxu0 0.0
    %481 = vmatprep.subr.mxu0 0.0
    %482 = vmatpush1.msra.mxu0 0.0
    %483 = vmatprep.subr.mxu0 0.0
    %484 = vmatpush1.msra.mxu0 0.0
    %485 = vmatprep.subr.mxu0 0.0
    %486 = vmatpush1.msra.mxu0 0.0
    %487 = vmatprep.subr.mxu0 0.0
    %488 = vmatpush1.msra.mxu0 0.0
    %489 = vmatprep.subr.mxu0 0.0
    %490 = vmatpush1.msra.mxu0 0.0
    %491 = vmatprep.subr.mxu0 0.0
    %492 = vmatpush1.msra.mxu0 0.0
    %493 = vmatprep.subr.mxu0 0.0
    %494 = vmatpush1.msra.mxu0 0.0
    %495 = vmatprep.subr.mxu0 0.0
    %496 = vmatpush1.msra.mxu0 0.0
    %497 = vmatprep.subr.mxu0 0.0
    %498 = vmatpush1.msra.mxu0 0.0
    %499 = vmatprep.mubr.f32.mxu0 0.0
    %500 = vmatmul.mubr.f32.gmra.mrb[0].mxu0 %v433
    %v501 = vpop.f32.mrb[0].mxu0
    %v502 = vadd.f32 0.0, %v501
    %v503 = vpop.f32.mrb[0].mxu0
    %504 = vdwg.mxu0
    %v505 = vadd.f32 %v431, %v502
    %v506 = vxor.u32 %v505, 2147483648
    %v507 = vmul.f32 %v506, 1.442695
    %v508 = vpow.pop %v507
    %v509 = vadd.f32 %v508, 1.0
    %v510 = vrcp.pop %v509
    %v511 = vmul.f32 1.0, %v510
    %v512 = vtanh.pop %v505
    %514 = vrot.lane.b32.xlu0 %v425, 32
    %v515 = vpop.permute.xlu0 %514
    %v517 = vmul.f32 %v511, %v515
    %519 = vrot.lane.b32.xlu0 %v512, 64
    %v520 = vpop.permute.xlu0 %519
    %v522 = vmul.f32 %v511, %v520
    %524 = vrot.lane.b32.xlu0 %v522, 32
    %v525 = vpop.permute.xlu0 %524
    %v527 = vadd.f32 %v517, %v525
    %v528 = vtanh.pop %v527
    %530 = vrot.lane.b32.xlu0 %v528, 64
    %v531 = vpop.permute.xlu0 %530
    %v533 = vmul.f32 %v511, %v531
    %v534 = vmul.f32 %v418, 0.1
    %v535 = vmul.f32 %v533, 0.9
    %537 = vrot.lane.b32.xlu0 %v535, 32
    %v538 = vpop.permute.xlu0 %537
    %v540 = vadd.f32 %v534, %v538
    %v541 = vmul.f32 %v425, 0.1
    %v542 = vmul.f32 %v527, 0.9
    %544 = vrot.lane.b32.xlu0 %v542, 96
    %v545 = vpop.permute.xlu0 %544
    %v547 = vadd.f32 %v541, %v545
    %s548 = scalar_lea.vmem [#allocation3], 16
    %549 = vst.msk [vmem:[%s548] sm:$0xff] %vm189, %v540
    %s550 = scalar_lea.vmem [#allocation5], 16
    %551 = vst.msk [vmem:[%s550] sm:$0xff] %vm189, %v547
    %s552 = scalar_lea.vmem [#allocation2], 24
    %v553 = vld [vmem:[%s552] sm:$0xff]
    %v555 = vsel %vm189, %v540, 0
    %557 = vmatprep.subr.mxu0 0.0
    %558 = vmatpush1.msra.mxu0 %v182
    %559 = vmatprep.subr.mxu0 0.0
    %560 = vmatpush1.msra.mxu0 %v183
    %561 = vmatprep.subr.mxu0 0.0
    %562 = vmatpush1.msra.mxu0 %v184
    %563 = vmatprep.subr.mxu0 0.0
    %564 = vmatpush1.msra.mxu0 %v185
    %565 = vmatprep.subr.mxu0 0.0
    %566 = vmatpush1.msra.mxu0 0.0
    %567 = vmatprep.subr.mxu0 0.0
    %568 = vmatpush1.msra.mxu0 0.0
    %569 = vmatprep.subr.mxu0 0.0
    %570 = vmatpush1.msra.mxu0 0.0
    %571 = vmatprep.subr.mxu0 0.0
    %572 = vmatpush1.msra.mxu0 0.0
    %573 = vmatprep.subr.mxu0 0.0
    %574 = vmatpush1.msra.mxu0 0.0
    %575 = vmatprep.subr.mxu0 0.0
    %576 = vmatpush1.msra.mxu0 0.0
    %577 = vmatprep.subr.mxu0 0.0
    %578 = vmatpush1.msra.mxu0 0.0
    %579 = vmatprep.subr.mxu0 0.0
    %580 = vmatpush1.msra.mxu0 0.0
    %581 = vmatprep.subr.mxu0 0.0
    %582 = vmatpush1.msra.mxu0 0.0
    %583 = vmatprep.subr.mxu0 0.0
    %584 = vmatpush1.msra.mxu0 0.0
    %585 = vmatprep.subr.mxu0 0.0
    %586 = vmatpush1.msra.mxu0 0.0
    %587 = vmatprep.subr.mxu0 0.0
    %588 = vmatpush1.msra.mxu0 0.0
    %589 = vmatprep.subr.mxu0 0.0
    %590 = vmatpush1.msra.mxu0 0.0
    %591 = vmatprep.subr.mxu0 0.0
    %592 = vmatpush1.msra.mxu0 0.0
    %593 = vmatprep.subr.mxu0 0.0
    %594 = vmatpush1.msra.mxu0 0.0
    %595 = vmatprep.subr.mxu0 0.0
    %596 = vmatpush1.msra.mxu0 0.0
    %597 = vmatprep.subr.mxu0 0.0
    %598 = vmatpush1.msra.mxu0 0.0
    %599 = vmatprep.subr.mxu0 0.0
    %600 = vmatpush1.msra.mxu0 0.0
    %601 = vmatprep.subr.mxu0 0.0
    %602 = vmatpush1.msra.mxu0 0.0
    %603 = vmatprep.subr.mxu0 0.0
    %604 = vmatpush1.msra.mxu0 0.0
    %605 = vmatprep.subr.mxu0 0.0
    %606 = vmatpush1.msra.mxu0 0.0
    %607 = vmatprep.subr.mxu0 0.0
    %608 = vmatpush1.msra.mxu0 0.0
    %609 = vmatprep.subr.mxu0 0.0
    %610 = vmatpush1.msra.mxu0 0.0
    %611 = vmatprep.subr.mxu0 0.0
    %612 = vmatpush1.msra.mxu0 0.0
    %613 = vmatprep.subr.mxu0 0.0
    %614 = vmatpush1.msra.mxu0 0.0
    %615 = vmatprep.subr.mxu0 0.0
    %616 = vmatpush1.msra.mxu0 0.0
    %617 = vmatprep.subr.mxu0 0.0
    %618 = vmatpush1.msra.mxu0 0.0
    %619 = vmatprep.subr.mxu0 0.0
    %620 = vmatpush1.msra.mxu0 0.0
    %621 = vmatprep.mubr.f32.mxu0 0.0
    %622 = vmatmul.mubr.f32.gmra.mrb[0].mxu0 %v555
    %v623 = vpop.f32.mrb[0].mxu0
    %v624 = vadd.f32 0.0, %v623
    %v625 = vpop.f32.mrb[0].mxu0
    %626 = vdwg.mxu0
    %v627 = vadd.f32 %v553, %v624
    %v628 = vxor.u32 %v627, 2147483648
    %v629 = vmul.f32 %v628, 1.442695
    %v630 = vpow.pop %v629
    %v631 = vadd.f32 %v630, 1.0
    %v632 = vrcp.pop %v631
    %v633 = vmul.f32 1.0, %v632
    %v634 = vtanh.pop %v627
    %636 = vrot.lane.b32.xlu0 %v547, 32
    %v637 = vpop.permute.xlu0 %636
    %v639 = vmul.f32 %v633, %v637
    %641 = vrot.lane.b32.xlu0 %v634, 64
    %v642 = vpop.permute.xlu0 %641
    %v644 = vmul.f32 %v633, %v642
    %646 = vrot.lane.b32.xlu0 %v644, 32
    %v647 = vpop.permute.xlu0 %646
    %v649 = vadd.f32 %v639, %v647
    %v650 = vtanh.pop %v649
    %652 = vrot.lane.b32.xlu0 %v650, 64
    %v653 = vpop.permute.xlu0 %652
    %v655 = vmul.f32 %v633, %v653
    %v656 = vmul.f32 %v540, 0.1
    %v657 = vmul.f32 %v655, 0.9
    %659 = vrot.lane.b32.xlu0 %v657, 32
    %v660 = vpop.permute.xlu0 %659
    %v662 = vadd.f32 %v656, %v660
    %v663 = vmul.f32 %v547, 0.1
    %v664 = vmul.f32 %v649, 0.9
    %666 = vrot.lane.b32.xlu0 %v664, 96
    %v667 = vpop.permute.xlu0 %666
    %v669 = vadd.f32 %v663, %v667
    %s670 = scalar_lea.vmem [#allocation3], 24
    %671 = vst.msk [vmem:[%s670] sm:$0xff] %vm189, %v662
    %s672 = scalar_lea.vmem [#allocation5], 24
    %673 = vst.msk [vmem:[%s672] sm:$0xff] %vm189, %v669
    %s674 = scalar_lea.vmem [#allocation2], 32
    %v675 = vld [vmem:[%s674] sm:$0xff]
    %v677 = vsel %vm189, %v662, 0
    %679 = vmatprep.subr.mxu0 0.0
    %680 = vmatpush1.msra.mxu0 %v182
    %681 = vmatprep.subr.mxu0 0.0
    %682 = vmatpush1.msra.mxu0 %v183
    %683 = vmatprep.subr.mxu0 0.0
    %684 = vmatpush1.msra.mxu0 %v184
    %685 = vmatprep.subr.mxu0 0.0
    %686 = vmatpush1.msra.mxu0 %v185
    %687 = vmatprep.subr.mxu0 0.0
    %688 = vmatpush1.msra.mxu0 0.0
    %689 = vmatprep.subr.mxu0 0.0
    %690 = vmatpush1.msra.mxu0 0.0
    %691 = vmatprep.subr.mxu0 0.0
    %692 = vmatpush1.msra.mxu0 0.0
    %693 = vmatprep.subr.mxu0 0.0
    %694 = vmatpush1.msra.mxu0 0.0
    %695 = vmatprep.subr.mxu0 0.0
    %696 = vmatpush1.msra.mxu0 0.0
    %697 = vmatprep.subr.mxu0 0.0
    %698 = vmatpush1.msra.mxu0 0.0
    %699 = vmatprep.subr.mxu0 0.0
    %700 = vmatpush1.msra.mxu0 0.0
    %701 = vmatprep.subr.mxu0 0.0
    %702 = vmatpush1.msra.mxu0 0.0
    %703 = vmatprep.subr.mxu0 0.0
    %704 = vmatpush1.msra.mxu0 0.0
    %705 = vmatprep.subr.mxu0 0.0
    %706 = vmatpush1.msra.mxu0 0.0
    %707 = vmatprep.subr.mxu0 0.0
    %708 = vmatpush1.msra.mxu0 0.0
    %709 = vmatprep.subr.mxu0 0.0
    %710 = vmatpush1.msra.mxu0 0.0
    %711 = vmatprep.subr.mxu0 0.0
    %712 = vmatpush1.msra.mxu0 0.0
    %713 = vmatprep.subr.mxu0 0.0
    %714 = vmatpush1.msra.mxu0 0.0
    %715 = vmatprep.subr.mxu0 0.0
    %716 = vmatpush1.msra.mxu0 0.0
    %717 = vmatprep.subr.mxu0 0.0
    %718 = vmatpush1.msra.mxu0 0.0
    %719 = vmatprep.subr.mxu0 0.0
    %720 = vmatpush1.msra.mxu0 0.0
    %721 = vmatprep.subr.mxu0 0.0
    %722 = vmatpush1.msra.mxu0 0.0
    %723 = vmatprep.subr.mxu0 0.0
    %724 = vmatpush1.msra.mxu0 0.0
    %725 = vmatprep.subr.mxu0 0.0
    %726 = vmatpush1.msra.mxu0 0.0
    %727 = vmatprep.subr.mxu0 0.0
    %728 = vmatpush1.msra.mxu0 0.0
    %729 = vmatprep.subr.mxu0 0.0
    %730 = vmatpush1.msra.mxu0 0.0
    %731 = vmatprep.subr.mxu0 0.0
    %732 = vmatpush1.msra.mxu0 0.0
    %733 = vmatprep.subr.mxu0 0.0
    %734 = vmatpush1.msra.mxu0 0.0
    %735 = vmatprep.subr.mxu0 0.0
    %736 = vmatpush1.msra.mxu0 0.0
    %737 = vmatprep.subr.mxu0 0.0
    %738 = vmatpush1.msra.mxu0 0.0
    %739 = vmatprep.subr.mxu0 0.0
    %740 = vmatpush1.msra.mxu0 0.0
    %741 = vmatprep.subr.mxu0 0.0
    %742 = vmatpush1.msra.mxu0 0.0
    %743 = vmatprep.mubr.f32.mxu0 0.0
    %744 = vmatmul.mubr.f32.gmra.mrb[0].mxu0 %v677
    %v745 = vpop.f32.mrb[0].mxu0
    %v746 = vadd.f32 0.0, %v745
    %v747 = vpop.f32.mrb[0].mxu0
    %748 = vdwg.mxu0
    %v749 = vadd.f32 %v675, %v746
    %v750 = vxor.u32 %v749, 2147483648
    %v751 = vmul.f32 %v750, 1.442695
    %v752 = vpow.pop %v751
    %v753 = vadd.f32 %v752, 1.0
    %v754 = vrcp.pop %v753
    %v755 = vmul.f32 1.0, %v754
    %v756 = vtanh.pop %v749
    %758 = vrot.lane.b32.xlu0 %v669, 32
    %v759 = vpop.permute.xlu0 %758
    %v761 = vmul.f32 %v755, %v759
    %763 = vrot.lane.b32.xlu0 %v756, 64
    %v764 = vpop.permute.xlu0 %763
    %v766 = vmul.f32 %v755, %v764
    %768 = vrot.lane.b32.xlu0 %v766, 32
    %v769 = vpop.permute.xlu0 %768
    %v771 = vadd.f32 %v761, %v769
    %v772 = vtanh.pop %v771
    %774 = vrot.lane.b32.xlu0 %v772, 64
    %v775 = vpop.permute.xlu0 %774
    %v777 = vmul.f32 %v755, %v775
    %v778 = vmul.f32 %v662, 0.1
    %v779 = vmul.f32 %v777, 0.9
    %781 = vrot.lane.b32.xlu0 %v779, 32
    %v782 = vpop.permute.xlu0 %781
    %v784 = vadd.f32 %v778, %v782
    %v785 = vmul.f32 %v669, 0.1
    %v786 = vmul.f32 %v771, 0.9
    %788 = vrot.lane.b32.xlu0 %v786, 96
    %v789 = vpop.permute.xlu0 %788
    %v791 = vadd.f32 %v785, %v789
    %s792 = scalar_lea.vmem [#allocation3], 32
    %793 = vst.msk [vmem:[%s792] sm:$0xff] %vm189, %v784
    %s794 = scalar_lea.vmem [#allocation5], 32
    %795 = vst.msk [vmem:[%s794] sm:$0xff] %vm189, %v791
    %s796 = scalar_lea.vmem [#allocation2], 40
    %v797 = vld [vmem:[%s796] sm:$0xff]
    %v799 = vsel %vm189, %v784, 0
    %801 = vmatprep.subr.mxu0 0.0
    %802 = vmatpush1.msra.mxu0 %v182
    %803 = vmatprep.subr.mxu0 0.0
    %804 = vmatpush1.msra.mxu0 %v183
    %805 = vmatprep.subr.mxu0 0.0
    %806 = vmatpush1.msra.mxu0 %v184
    %807 = vmatprep.subr.mxu0 0.0
    %808 = vmatpush1.msra.mxu0 %v185
    %809 = vmatprep.subr.mxu0 0.0
    %810 = vmatpush1.msra.mxu0 0.0
    %811 = vmatprep.subr.mxu0 0.0
    %812 = vmatpush1.msra.mxu0 0.0
    %813 = vmatprep.subr.mxu0 0.0
    %814 = vmatpush1.msra.mxu0 0.0
    %815 = vmatprep.subr.mxu0 0.0
    %816 = vmatpush1.msra.mxu0 0.0
    %817 = vmatprep.subr.mxu0 0.0
    %818 = vmatpush1.msra.mxu0 0.0
    %819 = vmatprep.subr.mxu0 0.0
    %820 = vmatpush1.msra.mxu0 0.0
    %821 = vmatprep.subr.mxu0 0.0
    %822 = vmatpush1.msra.mxu0 0.0
    %823 = vmatprep.subr.mxu0 0.0
    %824 = vmatpush1.msra.mxu0 0.0
    %825 = vmatprep.subr.mxu0 0.0
    %826 = vmatpush1.msra.mxu0 0.0
    %827 = vmatprep.subr.mxu0 0.0
    %828 = vmatpush1.msra.mxu0 0.0
    %829 = vmatprep.subr.mxu0 0.0
    %830 = vmatpush1.msra.mxu0 0.0
    %831 = vmatprep.subr.mxu0 0.0
    %832 = vmatpush1.msra.mxu0 0.0
    %833 = vmatprep.subr.mxu0 0.0
    %834 = vmatpush1.msra.mxu0 0.0
    %835 = vmatprep.subr.mxu0 0.0
    %836 = vmatpush1.msra.mxu0 0.0
    %837 = vmatprep.subr.mxu0 0.0
    %838 = vmatpush1.msra.mxu0 0.0
    %839 = vmatprep.subr.mxu0 0.0
    %840 = vmatpush1.msra.mxu0 0.0
    %841 = vmatprep.subr.mxu0 0.0
    %842 = vmatpush1.msra.mxu0 0.0
    %843 = vmatprep.subr.mxu0 0.0
    %844 = vmatpush1.msra.mxu0 0.0
    %845 = vmatprep.subr.mxu0 0.0
    %846 = vmatpush1.msra.mxu0 0.0
    %847 = vmatprep.subr.mxu0 0.0
    %848 = vmatpush1.msra.mxu0 0.0
    %849 = vmatprep.subr.mxu0 0.0
    %850 = vmatpush1.msra.mxu0 0.0
    %851 = vmatprep.subr.mxu0 0.0
    %852 = vmatpush1.msra.mxu0 0.0
    %853 = vmatprep.subr.mxu0 0.0
    %854 = vmatpush1.msra.mxu0 0.0
    %855 = vmatprep.subr.mxu0 0.0
    %856 = vmatpush1.msra.mxu0 0.0
    %857 = vmatprep.subr.mxu0 0.0
    %858 = vmatpush1.msra.mxu0 0.0
    %859 = vmatprep.subr.mxu0 0.0
    %860 = vmatpush1.msra.mxu0 0.0
    %861 = vmatprep.subr.mxu0 0.0
    %862 = vmatpush1.msra.mxu0 0.0
    %863 = vmatprep.subr.mxu0 0.0
    %864 = vmatpush1.msra.mxu0 0.0
    %865 = vmatprep.mubr.f32.mxu0 0.0
    %866 = vmatmul.mubr.f32.gmra.mrb[0].mxu0 %v799
    %v867 = vpop.f32.mrb[0].mxu0
    %v868 = vadd.f32 0.0, %v867
    %v869 = vpop.f32.mrb[0].mxu0
    %870 = vdwg.mxu0
    %v871 = vadd.f32 %v797, %v868
    %v872 = vxor.u32 %v871, 2147483648
    %v873 = vmul.f32 %v872, 1.442695
    %v874 = vpow.pop %v873
    %v875 = vadd.f32 %v874, 1.0
    %v876 = vrcp.pop %v875
    %v877 = vmul.f32 1.0, %v876
    %v878 = vtanh.pop %v871
    %880 = vrot.lane.b32.xlu0 %v791, 32
    %v881 = vpop.permute.xlu0 %880
    %v883 = vmul.f32 %v877, %v881
    %885 = vrot.lane.b32.xlu0 %v878, 64
    %v886 = vpop.permute.xlu0 %885
    %v888 = vmul.f32 %v877, %v886
    %890 = vrot.lane.b32.xlu0 %v888, 32
    %v891 = vpop.permute.xlu0 %890
    %v893 = vadd.f32 %v883, %v891
    %v894 = vtanh.pop %v893
    %896 = vrot.lane.b32.xlu0 %v894, 64
    %v897 = vpop.permute.xlu0 %896
    %v899 = vmul.f32 %v877, %v897
    %v900 = vmul.f32 %v784, 0.1
    %v901 = vmul.f32 %v899, 0.9
    %903 = vrot.lane.b32.xlu0 %v901, 32
    %v904 = vpop.permute.xlu0 %903
    %v906 = vadd.f32 %v900, %v904
    %v907 = vmul.f32 %v791, 0.1
    %v908 = vmul.f32 %v893, 0.9
    %910 = vrot.lane.b32.xlu0 %v908, 96
    %v911 = vpop.permute.xlu0 %910
    %v913 = vadd.f32 %v907, %v911
    %s914 = scalar_lea.vmem [#allocation3], 40
    %915 = vst.msk [vmem:[%s914] sm:$0xff] %vm189, %v906
    %s916 = scalar_lea.vmem [#allocation5], 40
    %917 = vst.msk [vmem:[%s916] sm:$0xff] %vm189, %v913
    %s918 = scalar_lea.vmem [#allocation2], 48
    %v919 = vld [vmem:[%s918] sm:$0xff]
    %v921 = vsel %vm189, %v906, 0
    %923 = vmatprep.subr.mxu0 0.0
    %924 = vmatpush1.msra.mxu0 %v182
    %925 = vmatprep.subr.mxu0 0.0
    %926 = vmatpush1.msra.mxu0 %v183
    %927 = vmatprep.subr.mxu0 0.0
    %928 = vmatpush1.msra.mxu0 %v184
    %929 = vmatprep.subr.mxu0 0.0
    %930 = vmatpush1.msra.mxu0 %v185
    %931 = vmatprep.subr.mxu0 0.0
    %932 = vmatpush1.msra.mxu0 0.0
    %933 = vmatprep.subr.mxu0 0.0
    %934 = vmatpush1.msra.mxu0 0.0
    %935 = vmatprep.subr.mxu0 0.0
    %936 = vmatpush1.msra.mxu0 0.0
    %937 = vmatprep.subr.mxu0 0.0
    %938 = vmatpush1.msra.mxu0 0.0
    %939 = vmatprep.subr.mxu0 0.0
    %940 = vmatpush1.msra.mxu0 0.0
    %941 = vmatprep.subr.mxu0 0.0
    %942 = vmatpush1.msra.mxu0 0.0
    %943 = vmatprep.subr.mxu0 0.0
    %944 = vmatpush1.msra.mxu0 0.0
    %945 = vmatprep.subr.mxu0 0.0
    %946 = vmatpush1.msra.mxu0 0.0
    %947 = vmatprep.subr.mxu0 0.0
    %948 = vmatpush1.msra.mxu0 0.0
    %949 = vmatprep.subr.mxu0 0.0
    %950 = vmatpush1.msra.mxu0 0.0
    %951 = vmatprep.subr.mxu0 0.0
    %952 = vmatpush1.msra.mxu0 0.0
    %953 = vmatprep.subr.mxu0 0.0
    %954 = vmatpush1.msra.mxu0 0.0
    %955 = vmatprep.subr.mxu0 0.0
    %956 = vmatpush1.msra.mxu0 0.0
    %957 = vmatprep.subr.mxu0 0.0
    %958 = vmatpush1.msra.mxu0 0.0
    %959 = vmatprep.subr.mxu0 0.0
    %960 = vmatpush1.msra.mxu0 0.0
    %961 = vmatprep.subr.mxu0 0.0
    %962 = vmatpush1.msra.mxu0 0.0
    %963 = vmatprep.subr.mxu0 0.0
    %964 = vmatpush1.msra.mxu0 0.0
    %965 = vmatprep.subr.mxu0 0.0
    %966 = vmatpush1.msra.mxu0 0.0
    %967 = vmatprep.subr.mxu0 0.0
    %968 = vmatpush1.msra.mxu0 0.0
    %969 = vmatprep.subr.mxu0 0.0
    %970 = vmatpush1.msra.mxu0 0.0
    %971 = vmatprep.subr.mxu0 0.0
    %972 = vmatpush1.msra.mxu0 0.0
    %973 = vmatprep.subr.mxu0 0.0
    %974 = vmatpush1.msra.mxu0 0.0
    %975 = vmatprep.subr.mxu0 0.0
    %976 = vmatpush1.msra.mxu0 0.0
    %977 = vmatprep.subr.mxu0 0.0
    %978 = vmatpush1.msra.mxu0 0.0
    %979 = vmatprep.subr.mxu0 0.0
    %980 = vmatpush1.msra.mxu0 0.0
    %981 = vmatprep.subr.mxu0 0.0
    %982 = vmatpush1.msra.mxu0 0.0
    %983 = vmatprep.subr.mxu0 0.0
    %984 = vmatpush1.msra.mxu0 0.0
    %985 = vmatprep.subr.mxu0 0.0
    %986 = vmatpush1.msra.mxu0 0.0
    %987 = vmatprep.mubr.f32.mxu0 0.0
    %988 = vmatmul.mubr.f32.gmra.mrb[0].mxu0 %v921
    %v989 = vpop.f32.mrb[0].mxu0
    %v990 = vadd.f32 0.0, %v989
    %v991 = vpop.f32.mrb[0].mxu0
    %992 = vdwg.mxu0
    %v993 = vadd.f32 %v919, %v990
    %v994 = vxor.u32 %v993, 2147483648
    %v995 = vmul.f32 %v994, 1.442695
    %v996 = vpow.pop %v995
    %v997 = vadd.f32 %v996, 1.0
    %v998 = vrcp.pop %v997
    %v999 = vmul.f32 1.0, %v998
    %v1000 = vtanh.pop %v993
    %1002 = vrot.lane.b32.xlu0 %v913, 32
    %v1003 = vpop.permute.xlu0 %1002
    %v1005 = vmul.f32 %v999, %v1003
    %1007 = vrot.lane.b32.xlu0 %v1000, 64
    %v1008 = vpop.permute.xlu0 %1007
    %v1010 = vmul.f32 %v999, %v1008
    %1012 = vrot.lane.b32.xlu0 %v1010, 32
    %v1013 = vpop.permute.xlu0 %1012
    %v1015 = vadd.f32 %v1005, %v1013
    %v1016 = vtanh.pop %v1015
    %1018 = vrot.lane.b32.xlu0 %v1016, 64
    %v1019 = vpop.permute.xlu0 %1018
    %v1021 = vmul.f32 %v999, %v1019
    %v1022 = vmul.f32 %v906, 0.1
    %v1023 = vmul.f32 %v1021, 0.9
    %1025 = vrot.lane.b32.xlu0 %v1023, 32
    %v1026 = vpop.permute.xlu0 %1025
    %v1028 = vadd.f32 %v1022, %v1026
    %v1029 = vmul.f32 %v913, 0.1
    %v1030 = vmul.f32 %v1015, 0.9
    %1032 = vrot.lane.b32.xlu0 %v1030, 96
    %v1033 = vpop.permute.xlu0 %1032
    %v1035 = vadd.f32 %v1029, %v1033
    %s1036 = scalar_lea.vmem [#allocation3], 48
    %1037 = vst.msk [vmem:[%s1036] sm:$0xff] %vm189, %v1028
    %s1038 = scalar_lea.vmem [#allocation5], 48
    %1039 = vst.msk [vmem:[%s1038] sm:$0xff] %vm189, %v1035
    %s1040 = scalar_lea.vmem [#allocation2], 56
    %v1041 = vld [vmem:[%s1040] sm:$0xff]
    %v1043 = vsel %vm189, %v1028, 0
    %1045 = vmatprep.subr.mxu0 0.0
    %1046 = vmatpush1.msra.mxu0 %v182
    %1047 = vmatprep.subr.mxu0 0.0
    %1048 = vmatpush1.msra.mxu0 %v183
    %1049 = vmatprep.subr.mxu0 0.0
    %1050 = vmatpush1.msra.mxu0 %v184
    %1051 = vmatprep.subr.mxu0 0.0
    %1052 = vmatpush1.msra.mxu0 %v185
    %1053 = vmatprep.subr.mxu0 0.0
    %1054 = vmatpush1.msra.mxu0 0.0
    %1055 = vmatprep.subr.mxu0 0.0
    %1056 = vmatpush1.msra.mxu0 0.0
    %1057 = vmatprep.subr.mxu0 0.0
    %1058 = vmatpush1.msra.mxu0 0.0
    %1059 = vmatprep.subr.mxu0 0.0
    %1060 = vmatpush1.msra.mxu0 0.0
    %1061 = vmatprep.subr.mxu0 0.0
    %1062 = vmatpush1.msra.mxu0 0.0
    %1063 = vmatprep.subr.mxu0 0.0
    %1064 = vmatpush1.msra.mxu0 0.0
    %1065 = vmatprep.subr.mxu0 0.0
    %1066 = vmatpush1.msra.mxu0 0.0
    %1067 = vmatprep.subr.mxu0 0.0
    %1068 = vmatpush1.msra.mxu0 0.0
    %1069 = vmatprep.subr.mxu0 0.0
    %1070 = vmatpush1.msra.mxu0 0.0
    %1071 = vmatprep.subr.mxu0 0.0
    %1072 = vmatpush1.msra.mxu0 0.0
    %1073 = vmatprep.subr.mxu0 0.0
    %1074 = vmatpush1.msra.mxu0 0.0
    %1075 = vmatprep.subr.mxu0 0.0
    %1076 = vmatpush1.msra.mxu0 0.0
    %1077 = vmatprep.subr.mxu0 0.0
    %1078 = vmatpush1.msra.mxu0 0.0
    %1079 = vmatprep.subr.mxu0 0.0
    %1080 = vmatpush1.msra.mxu0 0.0
    %1081 = vmatprep.subr.mxu0 0.0
    %1082 = vmatpush1.msra.mxu0 0.0
    %1083 = vmatprep.subr.mxu0 0.0
    %1084 = vmatpush1.msra.mxu0 0.0
    %1085 = vmatprep.subr.mxu0 0.0
    %1086 = vmatpush1.msra.mxu0 0.0
    %1087 = vmatprep.subr.mxu0 0.0
    %1088 = vmatpush1.msra.mxu0 0.0
    %1089 = vmatprep.subr.mxu0 0.0
    %1090 = vmatpush1.msra.mxu0 0.0
    %1091 = vmatprep.subr.mxu0 0.0
    %1092 = vmatpush1.msra.mxu0 0.0
    %1093 = vmatprep.subr.mxu0 0.0
    %1094 = vmatpush1.msra.mxu0 0.0
    %1095 = vmatprep.subr.mxu0 0.0
    %1096 = vmatpush1.msra.mxu0 0.0
    %1097 = vmatprep.subr.mxu0 0.0
    %1098 = vmatpush1.msra.mxu0 0.0
    %1099 = vmatprep.subr.mxu0 0.0
    %1100 = vmatpush1.msra.mxu0 0.0
    %1101 = vmatprep.subr.mxu0 0.0
    %1102 = vmatpush1.msra.mxu0 0.0
    %1103 = vmatprep.subr.mxu0 0.0
    %1104 = vmatpush1.msra.mxu0 0.0
    %1105 = vmatprep.subr.mxu0 0.0
    %1106 = vmatpush1.msra.mxu0 0.0
    %1107 = vmatprep.subr.mxu0 0.0
    %1108 = vmatpush1.msra.mxu0 0.0
    %1109 = vmatprep.mubr.f32.mxu0 0.0
    %1110 = vmatmul.mubr.f32.gmra.mrb[0].mxu0 %v1043
    %v1111 = vpop.f32.mrb[0].mxu0
    %v1112 = vadd.f32 0.0, %v1111
    %v1113 = vpop.f32.mrb[0].mxu0
    %1114 = vdwg.mxu0
    %v1115 = vadd.f32 %v1041, %v1112
    %v1116 = vxor.u32 %v1115, 2147483648
    %v1117 = vmul.f32 %v1116, 1.442695
    %v1118 = vpow.pop %v1117
    %v1119 = vadd.f32 %v1118, 1.0
    %v1120 = vrcp.pop %v1119
    %v1121 = vmul.f32 1.0, %v1120
    %v1122 = vtanh.pop %v1115
    %1124 = vrot.lane.b32.xlu0 %v1035, 32
    %v1125 = vpop.permute.xlu0 %1124
    %v1127 = vmul.f32 %v1121, %v1125
    %1129 = vrot.lane.b32.xlu0 %v1122, 64
    %v1130 = vpop.permute.xlu0 %1129
    %v1132 = vmul.f32 %v1121, %v1130
    %1134 = vrot.lane.b32.xlu0 %v1132, 32
    %v1135 = vpop.permute.xlu0 %1134
    %v1137 = vadd.f32 %v1127, %v1135
    %v1138 = vtanh.pop %v1137
    %1140 = vrot.lane.b32.xlu0 %v1138, 64
    %v1141 = vpop.permute.xlu0 %1140
    %v1143 = vmul.f32 %v1121, %v1141
    %v1144 = vmul.f32 %v1028, 0.1
    %v1145 = vmul.f32 %v1143, 0.9
    %1147 = vrot.lane.b32.xlu0 %v1145, 32
    %v1148 = vpop.permute.xlu0 %1147
    %v1150 = vadd.f32 %v1144, %v1148
    %v1151 = vmul.f32 %v1035, 0.1
    %v1152 = vmul.f32 %v1137, 0.9
    %1154 = vrot.lane.b32.xlu0 %v1152, 96
    %v1155 = vpop.permute.xlu0 %1154
    %v1157 = vadd.f32 %v1151, %v1155
    %s1158 = scalar_lea.vmem [#allocation3], 56
    %1159 = vst.msk [vmem:[%s1158] sm:$0xff] %vm189, %v1150
    %s1160 = scalar_lea.vmem [#allocation5], 56
    %1161 = vst.msk [vmem:[%s1160] sm:$0xff] %vm189, %v1157
    // Predicated region
    $region26: #{tpu_custom_call.1} parent=1 // pred_check
      _
    $region27: #{tpu_custom_call.1} parent=1 // pred_check_branch
      %1163 = sbr.rel (0) target = $region29
    $region28: #{tpu_custom_call.1} parent=1 // pred_region
      %s1165 = ssub.s32 1024, 1024
      %1166 = vsyncadd [#allocation4], %s1165
      %s1167 = sshll.u32 [#allocation3], 4
      %s1168 = int_to_ptr.vmem [resolvable:$true] %s1167
      %1173 = dma.vmem_to_hbm [thread:$0]  %s1168, 1024, %s6, [#allocation4], 128, 128, 8
    $region29: #{tpu_custom_call.1} parent=1 // pred_fallthru
      _
    // Predicated region
    $region30: #{tpu_custom_call.1} parent=1 // pred_check
      _
    $region31: #{tpu_custom_call.1} parent=1 // pred_check_branch
      %1175 = sbr.rel (0) target = $region33
    $region32: #{tpu_custom_call.1} parent=1 // pred_region
      %s1177 = ssub.s32 1024, 1024
      %1178 = vsyncadd [#allocation6], %s1177
      %s1179 = sshll.u32 [#allocation5], 4
      %s1180 = int_to_ptr.vmem [resolvable:$true] %s1179
      %1185 = dma.vmem_to_hbm [thread:$0]  %s1180, 1024, %s7, [#allocation6], 128, 128, 8
    $region33: #{tpu_custom_call.1} parent=1 // pred_fallthru
      _
    // Predicated region
    $region34: #{tpu_custom_call.1} parent=1 // pred_check
      _
    $region35: #{tpu_custom_call.1} parent=1 // pred_check_branch
      %1187 = sbr.rel (0) target = $region37
    $region36: #{tpu_custom_call.1} parent=1 // pred_region
      %1188 = dma.done [#allocation4], 1024
    $region37: #{tpu_custom_call.1} parent=1 // pred_fallthru
      _
    // Predicated region
    $region38: #{tpu_custom_call.1} parent=1 // pred_check
      _
    $region39: #{tpu_custom_call.1} parent=1 // pred_check_branch
      %1190 = sbr.rel (0) target = $region41
    $region40: #{tpu_custom_call.1} parent=1 // pred_region
      %1191 = dma.done [#allocation6], 1024
    $region41: #{tpu_custom_call.1} parent=1 // pred_fallthru
      _
    %1192 = vsyncpa [#allocation4], 1
    %1193 = vsyncpa [#allocation6], 1

</llo_original>
